<compile_context>
chip_gen: v7x
topology: tpu7x:2x2x1
jax: 0.10.0
libtpu: 0.0.40
codegen_flags: <defaults>
</compile_context>

<pallas_src>
import math

import jax
import jax.numpy as jnp
from jax.experimental import pallas as pl
from jax.experimental.pallas import tpu as pltpu

# ---------------- small synthetic BERT config ----------------
VOCAB = 64
HIDDEN = 32
N_HEADS = 4
HEAD_DIM = HIDDEN // N_HEADS
N_LAYERS = 2
FFN = 4 * HIDDEN
MAX_POS = 16
TYPE_VOCAB = 2
LN_EPS = 1e-12

# Row layout of the packed per-layer "small params" slab (one (8,128) f32 tile).
(_ROW_BQKV, _ROW_BO, _ROW_LN1G, _ROW_LN1B,
 _ROW_B1, _ROW_B2, _ROW_LN2G, _ROW_LN2B) = range(8)


def _ln(x, g, b):
    """LayerNorm over the last axis (used both in-kernel and in JAX glue)."""
    mu = jnp.mean(x, axis=-1, keepdims=True)
    var = jnp.mean((x - mu) ** 2, axis=-1, keepdims=True)
    return (x - mu) * jax.lax.rsqrt(var + LN_EPS) * g + b


# ---------------- fused whole-encoder-stack Pallas kernel ----------------
def _encoder_stack_kernel(x_ref, mask_ref, wqkv_ref, wo_ref, w1_ref, w2_ref,
                          small_ref, hs_ref, x_carry, ctx_vmem):
    B, S = mask_ref.shape          # static at trace time
    layer = pl.program_id(0)

    # Initialize the VMEM hidden-state carry from the embedding output once.
    @pl.when(layer == 0)
    def _():
        x_carry[...] = x_ref[...]

    x = x_carry[...]               # (B*S, H) — resident across the layer grid

    # Packed small params: one (8,128) tile per layer, sliced in-register.
    small = small_ref[0]
    bqkv = small[_ROW_BQKV:_ROW_BQKV + 1, :3 * HIDDEN]
    bo = small[_ROW_BO:_ROW_BO + 1, :HIDDEN]
    ln1_g = small[_ROW_LN1G:_ROW_LN1G + 1, :HIDDEN]
    ln1_b = small[_ROW_LN1B:_ROW_LN1B + 1, :HIDDEN]
    b1 = small[_ROW_B1:_ROW_B1 + 1, :FFN]
    b2 = small[_ROW_B2:_ROW_B2 + 1, :HIDDEN]
    ln2_g = small[_ROW_LN2G:_ROW_LN2G + 1, :HIDDEN]
    ln2_b = small[_ROW_LN2B:_ROW_LN2B + 1, :HIDDEN]

    # ---- fused QKV projection: one MXU matmul for the whole (B*S) slab ----
    qkv = jnp.dot(x, wqkv_ref[0],
                  preferred_element_type=jnp.float32) + bqkv     # (B*S, 3H)

    scale = 1.0 / math.sqrt(HEAD_DIM)

    # ---- multi-head self-attention.  Per-(batch,head) loops are unrolled at
    # trace time (B=2, N_HEADS=4).  Each head's context goes into its lane
    # slice of ctx_vmem so the output projection is ONE matmul afterwards.
    # (At real head_dim>=64 the score/ctx matmuls would be batched instead of
    # looped — at HEAD_DIM=8 they cannot saturate the MXU either way.)
    for b in range(B):
        rows = slice(b * S, (b + 1) * S)
        add_mask_b = mask_ref[b:b + 1, :]                        # (1, S)
        for h in range(N_HEADS):
            q = qkv[rows, h * HEAD_DIM:(h + 1) * HEAD_DIM]
            k = qkv[rows, HIDDEN + h * HEAD_DIM:HIDDEN + (h + 1) * HEAD_DIM]
            v = qkv[rows, 2 * HIDDEN + h * HEAD_DIM:2 * HIDDEN + (h + 1) * HEAD_DIM]

            # scores = q @ k^T (contract head_dim with head_dim, no transpose)
            s = jax.lax.dot_general(q, k, (((1,), (1,)), ((), ())),
                                    preferred_element_type=jnp.float32) * scale
            s = s + add_mask_b
            s = s - jnp.max(s, axis=-1, keepdims=True)
            p = jnp.exp(s)
            # reciprocal on the EUP slot instead of a full-precision divide
            p = p * pl.reciprocal(jnp.sum(p, axis=-1, keepdims=True), approx=True)

            ctx_vmem[rows, h * HEAD_DIM:(h + 1) * HEAD_DIM] = jnp.dot(
                p, v, preferred_element_type=jnp.float32)

    # ---- single output projection over all rows / heads ----
    ctx = ctx_vmem[...]                                          # (B*S, H)
    attn = jnp.dot(ctx, wo_ref[0], preferred_element_type=jnp.float32) + bo

    # ---- Add & LayerNorm 1 ----
    x1 = _ln(attn + x, ln1_g, ln1_b)

    # ---- FFN (GELU) ----
    h1 = jnp.dot(x1, w1_ref[0], preferred_element_type=jnp.float32) + b1
    # TODO(synk): HF BERT uses exact erf-GELU; tanh approximation kept here.
    h1 = jax.nn.gelu(h1, approximate=True)
    f = jnp.dot(h1, w2_ref[0], preferred_element_type=jnp.float32) + b2

    # ---- Add & LayerNorm 2 ----
    x2 = _ln(f + x1, ln2_g, ln2_b)

    # Carry to the next layer (grid step) and emit this layer's hidden state.
    x_carry[...] = x2
    hs_ref[0] = x2


def encoder_stack(x_emb, add_mask, lp):
    """One fused pallas_call running ALL encoder layers; returns every
    layer's hidden state as (N_LAYERS, B, S, H)."""
    B, S, H = x_emb.shape
    hs = pl.pallas_call(
        _encoder_stack_kernel,
        out_shape=jax.ShapeDtypeStruct((N_LAYERS, B * S, H), jnp.float32),
        grid=(N_LAYERS,),              # sequential layer loop (carry dependency)
        in_specs=[
            pl.BlockSpec((B * S, H), lambda l: (0, 0)),        # x0 (read at l==0)
            pl.BlockSpec((B, S), lambda l: (0, 0)),            # additive mask
            pl.BlockSpec((1, H, 3 * H), lambda l: (l, 0, 0)),  # wqkv (fused QKV)
            pl.BlockSpec((1, H, H), lambda l: (l, 0, 0)),      # wo
            pl.BlockSpec((1, H, FFN), lambda l: (l, 0, 0)),    # w1
            pl.BlockSpec((1, FFN, H), lambda l: (l, 0, 0)),    # w2
            pl.BlockSpec((1, 8, 128), lambda l: (l, 0, 0)),    # packed small params
        ],
        out_specs=pl.BlockSpec((1, B * S, H), lambda l: (l, 0, 0)),
        scratch_shapes=[
            pltpu.VMEM((B * S, H), jnp.float32),   # hidden-state carry
            pltpu.VMEM((B * S, H), jnp.float32),   # all-head context buffer
        ],
        compiler_params=pltpu.CompilerParams(
            # Layer axis is a true sequential dependency.  On v7x one would
            # prepend a "parallel" batch/seq-tile axis for the 2nd TensorCore;
            # at real BERT-base sizes also set vmem_limit_bytes explicitly.
            dimension_semantics=("arbitrary",)),
    )(x_emb.reshape(B * S, H), add_mask,
      lp["wqkv"], lp["wo"], lp["w1"], lp["w2"], lp["small"])
    return hs.reshape(N_LAYERS, B, S, H)


# ---------------- parameter init (deterministic, stacked per layer) ----------------
def _pack_small_params(key):
    """Pack the 8 tiny per-layer vectors into one (8,128) tile per layer."""
    kq, ko, k1, k2 = jax.random.split(key, 4)
    bqkv = 0.02 * jax.random.normal(kq, (N_LAYERS, 3 * HIDDEN), jnp.float32)
    bo = 0.02 * jax.random.normal(ko, (N_LAYERS, HIDDEN), jnp.float32)
    b1 = 0.02 * jax.random.normal(k1, (N_LAYERS, FFN), jnp.float32)
    b2 = 0.02 * jax.random.normal(k2, (N_LAYERS, HIDDEN), jnp.float32)
    ln_g = jnp.ones((N_LAYERS, HIDDEN), jnp.float32)
    ln_b = jnp.zeros((N_LAYERS, HIDDEN), jnp.float32)

    slab = jnp.zeros((N_LAYERS, 8, 128), jnp.float32)
    slab = slab.at[:, _ROW_BQKV, :3 * HIDDEN].set(bqkv)
    slab = slab.at[:, _ROW_BO, :HIDDEN].set(bo)
    slab = slab.at[:, _ROW_LN1G, :HIDDEN].set(ln_g)
    slab = slab.at[:, _ROW_LN1B, :HIDDEN].set(ln_b)
    slab = slab.at[:, _ROW_B1, :FFN].set(b1)
    slab = slab.at[:, _ROW_B2, :HIDDEN].set(b2)
    slab = slab.at[:, _ROW_LN2G, :HIDDEN].set(ln_g)
    slab = slab.at[:, _ROW_LN2B, :HIDDEN].set(ln_b)
    return slab


def init_params(key):
    def nrm(k, shape):
        return 0.02 * jax.random.normal(k, shape, jnp.float32)

    ks = iter(jax.random.split(key, 16))
    return {
        "word_emb": nrm(next(ks), (VOCAB, HIDDEN)),
        "pos_emb": nrm(next(ks), (MAX_POS, HIDDEN)),
        "type_emb": nrm(next(ks), (TYPE_VOCAB, HIDDEN)),
        "emb_ln_g": jnp.ones((HIDDEN,), jnp.float32),
        "emb_ln_b": jnp.zeros((HIDDEN,), jnp.float32),
        "pool_w": nrm(next(ks), (HIDDEN, HIDDEN)),
        "pool_b": jnp.zeros((HIDDEN,), jnp.float32),
        "layers": {
            # Q|K|V fused along the output axis: cols [0:H)=Q, [H:2H)=K, [2H:3H)=V
            "wqkv": nrm(next(ks), (N_LAYERS, HIDDEN, 3 * HIDDEN)),
            "wo": nrm(next(ks), (N_LAYERS, HIDDEN, HIDDEN)),
            "w1": nrm(next(ks), (N_LAYERS, HIDDEN, FFN)),
            "w2": nrm(next(ks), (N_LAYERS, FFN, HIDDEN)),
            "small": _pack_small_params(next(ks)),
        },
    }


# ---------------- forward (HF-style outputs) ----------------
def transformer_layer_forward(params, input_ids, attention_mask):
    B, S = input_ids.shape

    # Embeddings + embedding-LayerNorm + pooler stay in plain JAX: pure glue,
    # ~100% launch overhead as kernels (per perf review).
    # token_type ids default to 0, matching HF when token_type_ids are absent.
    emb = (params["word_emb"][input_ids]
           + params["pos_emb"][jnp.arange(S)][None, :, :]
           + params["type_emb"][jnp.zeros((B, S), jnp.int32)])
    x0 = _ln(emb, params["emb_ln_g"], params["emb_ln_b"])

    # Additive mask: 0 where attend, -1e9 where masked.  Fully-masked query
    # rows become uniform over masked keys (acceptable for padding masks).
    add_mask = (1.0 - attention_mask.astype(jnp.float32)) * -1e9     # (B, S)

    hs = encoder_stack(x0, add_mask, params["layers"])   # one fused Pallas call
    hidden_states = (x0,) + tuple(hs[l] for l in range(N_LAYERS))
    x_last = hidden_states[-1]

    pooled = jnp.tanh(x_last[:, 0, :] @ params["pool_w"] + params["pool_b"])

    return {
        "last_hidden_state": x_last,
        "pooler_output": pooled,
        "hidden_states": hidden_states,
    }


if __name__ == "__main__":
    key = jax.random.PRNGKey(0)
    k_param, k_ids = jax.random.split(key)

    B, S = 2, 8
    params = init_params(k_param)
    input_ids = jax.random.randint(k_ids, (B, S), 0, VOCAB, dtype=jnp.int32)
    attention_mask = jnp.ones((B, S), jnp.int32).at[1, 6:].set(0)  # ragged mask

    outputs = jax.jit(transformer_layer_forward)(params, input_ids, attention_mask)
    jax.block_until_ready(outputs["last_hidden_state"])
    jax.block_until_ready(outputs["pooler_output"])

    assert outputs["last_hidden_state"].shape == (B, S, HIDDEN)
    assert outputs["pooler_output"].shape == (B, HIDDEN)
    assert len(outputs["hidden_states"]) == N_LAYERS + 1
    assert all(bool(jnp.isfinite(h).all()) for h in outputs["hidden_states"])
    print("KERNEL_OK")
</pallas_src>

<mosaic_0001>
module attributes {stable_mosaic.version = 11 : i64} {
  func.func @_encoder_stack_kernel(%arg0: i32, %arg1: memref<16x32xf32, #tpu.memory_space<vmem>>, %arg2: memref<2x8xf32, #tpu.memory_space<vmem>>, %arg3: memref<1x32x96xf32, #tpu.memory_space<vmem>>, %arg4: memref<1x32x32xf32, #tpu.memory_space<vmem>>, %arg5: memref<1x32x128xf32, #tpu.memory_space<vmem>>, %arg6: memref<1x128x32xf32, #tpu.memory_space<vmem>>, %arg7: memref<1x8x128xf32, #tpu.memory_space<vmem>>, %arg8: memref<1x16x32xf32, #tpu.memory_space<vmem>>, %arg9: memref<16x32xf32, #tpu.memory_space<vmem>>, %arg10: memref<16x32xf32, #tpu.memory_space<vmem>>) attributes {dimension_semantics = [#tpu.dimension_semantics<arbitrary>], iteration_bounds = array<i64: 2>, scalar_prefetch = 0 : i64, scratch_operands = 2 : i64, tpu.core_type = #tpu.core_type<tc>, window_params = [{pipeline_mode = #tpu.pipeline_mode<synchronous>, transform_indices = @transform_0, window_bounds = array<i64: 16, 32>}, {pipeline_mode = #tpu.pipeline_mode<synchronous>, transform_indices = @transform_1, window_bounds = array<i64: 2, 8>}, {transform_indices = @transform_2, window_bounds = array<i64: 1, 32, 96>}, {transform_indices = @transform_3, window_bounds = array<i64: 1, 32, 32>}, {transform_indices = @transform_4, window_bounds = array<i64: 1, 32, 128>}, {transform_indices = @transform_5, window_bounds = array<i64: 1, 128, 32>}, {transform_indices = @transform_6, window_bounds = array<i64: 1, 8, 128>}, {transform_indices = @transform_7, window_bounds = array<i64: 1, 16, 32>}]} {
    %c0_i32 = arith.constant 0 : i32
    %0 = arith.cmpi eq, %arg0, %c0_i32 : i32
    %1 = arith.extui %0 : i1 to i32
    %c0_i32_0 = arith.constant 0 : i32
    %2 = arith.cmpi ne, %1, %c0_i32_0 : i32
    scf.if %2 {
      %c0_97 = arith.constant 0 : index
      %c0_98 = arith.constant 0 : index
      %260 = vector.load %arg1[%c0_97, %c0_98] : memref<16x32xf32, #tpu.memory_space<vmem>>, vector<16x32xf32>
      %c0_99 = arith.constant 0 : index
      %c0_100 = arith.constant 0 : index
      %261 = vector.load %arg9[%c0_99, %c0_100] : memref<16x32xf32, #tpu.memory_space<vmem>>, vector<16x32xf32>
      tpu.vector_store %arg9[%c0_99, %c0_100], %260 {strides = array<i32>} : memref<16x32xf32, #tpu.memory_space<vmem>>, vector<16x32xf32>,
    } else {
    }
    %c0 = arith.constant 0 : index
    %c0_1 = arith.constant 0 : index
    %3 = vector.load %arg9[%c0, %c0_1] : memref<16x32xf32, #tpu.memory_space<vmem>>, vector<16x32xf32>
    %c0_2 = arith.constant 0 : index
    %c0_3 = arith.constant 0 : index
    %c0_4 = arith.constant 0 : index
    %4 = vector.load %arg7[%c0_2, %c0_3, %c0_4] : memref<1x8x128xf32, #tpu.memory_space<vmem>>, vector<1x8x128xf32>
    %5 = vector.shape_cast %4 : vector<1x8x128xf32> to vector<8x128xf32>
    %6 = vector.extract_strided_slice %5 {offsets = [0, 0], sizes = [1, 96], strides = [1, 1]} : vector<8x128xf32> to vector<1x96xf32>
    %7 = vector.extract_strided_slice %5 {offsets = [1, 0], sizes = [1, 32], strides = [1, 1]} : vector<8x128xf32> to vector<1x32xf32>
    %8 = vector.extract_strided_slice %5 {offsets = [2, 0], sizes = [1, 32], strides = [1, 1]} : vector<8x128xf32> to vector<1x32xf32>
    %9 = vector.extract_strided_slice %5 {offsets = [3, 0], sizes = [1, 32], strides = [1, 1]} : vector<8x128xf32> to vector<1x32xf32>
    %10 = vector.extract_strided_slice %5 {offsets = [4, 0], sizes = [1, 128], strides = [1, 1]} : vector<8x128xf32> to vector<1x128xf32>
    %11 = vector.extract_strided_slice %5 {offsets = [5, 0], sizes = [1, 32], strides = [1, 1]} : vector<8x128xf32> to vector<1x32xf32>
    %12 = vector.extract_strided_slice %5 {offsets = [6, 0], sizes = [1, 32], strides = [1, 1]} : vector<8x128xf32> to vector<1x32xf32>
    %13 = vector.extract_strided_slice %5 {offsets = [7, 0], sizes = [1, 32], strides = [1, 1]} : vector<8x128xf32> to vector<1x32xf32>
    %c0_5 = arith.constant 0 : index
    %c0_6 = arith.constant 0 : index
    %c0_7 = arith.constant 0 : index
    %14 = vector.load %arg3[%c0_5, %c0_6, %c0_7] : memref<1x32x96xf32, #tpu.memory_space<vmem>>, vector<1x32x96xf32>
    %15 = vector.shape_cast %14 : vector<1x32x96xf32> to vector<32x96xf32>
    %cst = arith.constant dense<0.000000e+00> : vector<16x96xf32>
    %16 = tpu.matmul %3, %15, %cst {dimension_numbers = #tpu.dot_dimension_numbers<[1], [0], [0], [1], [0, 0, 1, 1], [], []>} : vector<16x32xf32>, vector<32x96xf32>, vector<16x96xf32> -> vector<16x96xf32>
    %17 = vector.broadcast %6 : vector<1x96xf32> to vector<16x96xf32>
    %18 = arith.addf %16, %17 : vector<16x96xf32>
    %c0_8 = arith.constant 0 : index
    %c0_9 = arith.constant 0 : index
    %19 = vector.load %arg2[%c0_8, %c0_9] : memref<2x8xf32, #tpu.memory_space<vmem>>, vector<1x8xf32>
    %20 = vector.extract_strided_slice %18 {offsets = [0, 0], sizes = [8, 8], strides = [1, 1]} : vector<16x96xf32> to vector<8x8xf32>
    %21 = vector.extract_strided_slice %18 {offsets = [0, 32], sizes = [8, 8], strides = [1, 1]} : vector<16x96xf32> to vector<8x8xf32>
    %22 = vector.extract_strided_slice %18 {offsets = [0, 64], sizes = [8, 8], strides = [1, 1]} : vector<16x96xf32> to vector<8x8xf32>
    %cst_10 = arith.constant dense<0.000000e+00> : vector<8x8xf32>
    %23 = tpu.matmul %20, %21, %cst_10 {dimension_numbers = #tpu.dot_dimension_numbers<[1], [1], [0], [0], [0, 0, 1, 0], [], []>} : vector<8x8xf32>, vector<8x8xf32>, vector<8x8xf32> -> vector<8x8xf32>
    %cst_11 = arith.constant 0.353553385 : f32
    %24 = vector.broadcast %cst_11 : f32 to vector<8x8xf32>
    %25 = arith.mulf %23, %24 : vector<8x8xf32>
    %26 = vector.broadcast %19 : vector<1x8xf32> to vector<8x8xf32>
    %27 = arith.addf %25, %26 : vector<8x8xf32>
    %cst_12 = arith.constant dense<0xFF800000> : vector<8xf32>
    %28 = vector.multi_reduction <maximumf>, %27, %cst_12 [1] : vector<8x8xf32> to vector<8xf32>
    %29 = vector.shape_cast %28 : vector<8xf32> to vector<8x1xf32>
    %30 = vector.broadcast %29 : vector<8x1xf32> to vector<8x8xf32>
    %31 = arith.subf %27, %30 : vector<8x8xf32>
    %32 = math.exp %31 : vector<8x8xf32>
    %cst_13 = arith.constant dense<0.000000e+00> : vector<8xf32>
    %33 = vector.multi_reduction <add>, %32, %cst_13 [1] : vector<8x8xf32> to vector<8xf32>
    %34 = vector.shape_cast %33 : vector<8xf32> to vector<8x1xf32>
    %35 = tpu.reciprocal %34 {approx = true} : vector<8x1xf32> -> vector<8x1xf32>
    %36 = vector.broadcast %35 : vector<8x1xf32> to vector<8x8xf32>
    %37 = arith.mulf %32, %36 : vector<8x8xf32>
    %cst_14 = arith.constant dense<0.000000e+00> : vector<8x8xf32>
    %38 = tpu.matmul %37, %22, %cst_14 {dimension_numbers = #tpu.dot_dimension_numbers<[1], [0], [0], [1], [0, 0, 1, 1], [], []>} : vector<8x8xf32>, vector<8x8xf32>, vector<8x8xf32> -> vector<8x8xf32>
    %c0_15 = arith.constant 0 : index
    %c0_16 = arith.constant 0 : index
    %39 = vector.load %arg10[%c0_15, %c0_16] : memref<16x32xf32, #tpu.memory_space<vmem>>, vector<8x8xf32>
    tpu.vector_store %arg10[%c0_15, %c0_16], %38 {strides = array<i32>} : memref<16x32xf32, #tpu.memory_space<vmem>>, vector<8x8xf32>,
    %40 = vector.extract_strided_slice %18 {offsets = [0, 8], sizes = [8, 8], strides = [1, 1]} : vector<16x96xf32> to vector<8x8xf32>
    %41 = vector.extract_strided_slice %18 {offsets = [0, 40], sizes = [8, 8], strides = [1, 1]} : vector<16x96xf32> to vector<8x8xf32>
    %42 = vector.extract_strided_slice %18 {offsets = [0, 72], sizes = [8, 8], strides = [1, 1]} : vector<16x96xf32> to vector<8x8xf32>
    %cst_17 = arith.constant dense<0.000000e+00> : vector<8x8xf32>
    %43 = tpu.matmul %40, %41, %cst_17 {dimension_numbers = #tpu.dot_dimension_numbers<[1], [1], [0], [0], [0, 0, 1, 0], [], []>} : vector<8x8xf32>, vector<8x8xf32>, vector<8x8xf32> -> vector<8x8xf32>
    %cst_18 = arith.constant 0.353553385 : f32
    %44 = vector.broadcast %cst_18 : f32 to vector<8x8xf32>
    %45 = arith.mulf %43, %44 : vector<8x8xf32>
    %46 = vector.broadcast %19 : vector<1x8xf32> to vector<8x8xf32>
    %47 = arith.addf %45, %46 : vector<8x8xf32>
    %cst_19 = arith.constant dense<0xFF800000> : vector<8xf32>
    %48 = vector.multi_reduction <maximumf>, %47, %cst_19 [1] : vector<8x8xf32> to vector<8xf32>
    %49 = vector.shape_cast %48 : vector<8xf32> to vector<8x1xf32>
    %50 = vector.broadcast %49 : vector<8x1xf32> to vector<8x8xf32>
    %51 = arith.subf %47, %50 : vector<8x8xf32>
    %52 = math.exp %51 : vector<8x8xf32>
    %cst_20 = arith.constant dense<0.000000e+00> : vector<8xf32>
    %53 = vector.multi_reduction <add>, %52, %cst_20 [1] : vector<8x8xf32> to vector<8xf32>
    %54 = vector.shape_cast %53 : vector<8xf32> to vector<8x1xf32>
    %55 = tpu.reciprocal %54 {approx = true} : vector<8x1xf32> -> vector<8x1xf32>
    %56 = vector.broadcast %55 : vector<8x1xf32> to vector<8x8xf32>
    %57 = arith.mulf %52, %56 : vector<8x8xf32>
    %cst_21 = arith.constant dense<0.000000e+00> : vector<8x8xf32>
    %58 = tpu.matmul %57, %42, %cst_21 {dimension_numbers = #tpu.dot_dimension_numbers<[1], [0], [0], [1], [0, 0, 1, 1], [], []>} : vector<8x8xf32>, vector<8x8xf32>, vector<8x8xf32> -> vector<8x8xf32>
    %c0_22 = arith.constant 0 : index
    %c8 = arith.constant 8 : index
    %59 = vector.load %arg10[%c0_22, %c8] : memref<16x32xf32, #tpu.memory_space<vmem>>, vector<8x8xf32>
    tpu.vector_store %arg10[%c0_22, %c8], %58 {strides = array<i32>} : memref<16x32xf32, #tpu.memory_space<vmem>>, vector<8x8xf32>,
    %60 = vector.extract_strided_slice %18 {offsets = [0, 16], sizes = [8, 8], strides = [1, 1]} : vector<16x96xf32> to vector<8x8xf32>
    %61 = vector.extract_strided_slice %18 {offsets = [0, 48], sizes = [8, 8], strides = [1, 1]} : vector<16x96xf32> to vector<8x8xf32>
    %62 = vector.extract_strided_slice %18 {offsets = [0, 80], sizes = [8, 8], strides = [1, 1]} : vector<16x96xf32> to vector<8x8xf32>
    %cst_23 = arith.constant dense<0.000000e+00> : vector<8x8xf32>
    %63 = tpu.matmul %60, %61, %cst_23 {dimension_numbers = #tpu.dot_dimension_numbers<[1], [1], [0], [0], [0, 0, 1, 0], [], []>} : vector<8x8xf32>, vector<8x8xf32>, vector<8x8xf32> -> vector<8x8xf32>
    %cst_24 = arith.constant 0.353553385 : f32
    %64 = vector.broadcast %cst_24 : f32 to vector<8x8xf32>
    %65 = arith.mulf %63, %64 : vector<8x8xf32>
    %66 = vector.broadcast %19 : vector<1x8xf32> to vector<8x8xf32>
    %67 = arith.addf %65, %66 : vector<8x8xf32>
    %cst_25 = arith.constant dense<0xFF800000> : vector<8xf32>
    %68 = vector.multi_reduction <maximumf>, %67, %cst_25 [1] : vector<8x8xf32> to vector<8xf32>
    %69 = vector.shape_cast %68 : vector<8xf32> to vector<8x1xf32>
    %70 = vector.broadcast %69 : vector<8x1xf32> to vector<8x8xf32>
    %71 = arith.subf %67, %70 : vector<8x8xf32>
    %72 = math.exp %71 : vector<8x8xf32>
    %cst_26 = arith.constant dense<0.000000e+00> : vector<8xf32>
    %73 = vector.multi_reduction <add>, %72, %cst_26 [1] : vector<8x8xf32> to vector<8xf32>
    %74 = vector.shape_cast %73 : vector<8xf32> to vector<8x1xf32>
    %75 = tpu.reciprocal %74 {approx = true} : vector<8x1xf32> -> vector<8x1xf32>
    %76 = vector.broadcast %75 : vector<8x1xf32> to vector<8x8xf32>
    %77 = arith.mulf %72, %76 : vector<8x8xf32>
    %cst_27 = arith.constant dense<0.000000e+00> : vector<8x8xf32>
    %78 = tpu.matmul %77, %62, %cst_27 {dimension_numbers = #tpu.dot_dimension_numbers<[1], [0], [0], [1], [0, 0, 1, 1], [], []>} : vector<8x8xf32>, vector<8x8xf32>, vector<8x8xf32> -> vector<8x8xf32>
    %c0_28 = arith.constant 0 : index
    %c16 = arith.constant 16 : index
    %79 = vector.load %arg10[%c0_28, %c16] : memref<16x32xf32, #tpu.memory_space<vmem>>, vector<8x8xf32>
    tpu.vector_store %arg10[%c0_28, %c16], %78 {strides = array<i32>} : memref<16x32xf32, #tpu.memory_space<vmem>>, vector<8x8xf32>,
    %80 = vector.extract_strided_slice %18 {offsets = [0, 24], sizes = [8, 8], strides = [1, 1]} : vector<16x96xf32> to vector<8x8xf32>
    %81 = vector.extract_strided_slice %18 {offsets = [0, 56], sizes = [8, 8], strides = [1, 1]} : vector<16x96xf32> to vector<8x8xf32>
    %82 = vector.extract_strided_slice %18 {offsets = [0, 88], sizes = [8, 8], strides = [1, 1]} : vector<16x96xf32> to vector<8x8xf32>
    %cst_29 = arith.constant dense<0.000000e+00> : vector<8x8xf32>
    %83 = tpu.matmul %80, %81, %cst_29 {dimension_numbers = #tpu.dot_dimension_numbers<[1], [1], [0], [0], [0, 0, 1, 0], [], []>} : vector<8x8xf32>, vector<8x8xf32>, vector<8x8xf32> -> vector<8x8xf32>
    %cst_30 = arith.constant 0.353553385 : f32
    %84 = vector.broadcast %cst_30 : f32 to vector<8x8xf32>
    %85 = arith.mulf %83, %84 : vector<8x8xf32>
    %86 = vector.broadcast %19 : vector<1x8xf32> to vector<8x8xf32>
    %87 = arith.addf %85, %86 : vector<8x8xf32>
    %cst_31 = arith.constant dense<0xFF800000> : vector<8xf32>
    %88 = vector.multi_reduction <maximumf>, %87, %cst_31 [1] : vector<8x8xf32> to vector<8xf32>
    %89 = vector.shape_cast %88 : vector<8xf32> to vector<8x1xf32>
    %90 = vector.broadcast %89 : vector<8x1xf32> to vector<8x8xf32>
    %91 = arith.subf %87, %90 : vector<8x8xf32>
    %92 = math.exp %91 : vector<8x8xf32>
    %cst_32 = arith.constant dense<0.000000e+00> : vector<8xf32>
    %93 = vector.multi_reduction <add>, %92, %cst_32 [1] : vector<8x8xf32> to vector<8xf32>
    %94 = vector.shape_cast %93 : vector<8xf32> to vector<8x1xf32>
    %95 = tpu.reciprocal %94 {approx = true} : vector<8x1xf32> -> vector<8x1xf32>
    %96 = vector.broadcast %95 : vector<8x1xf32> to vector<8x8xf32>
    %97 = arith.mulf %92, %96 : vector<8x8xf32>
    %cst_33 = arith.constant dense<0.000000e+00> : vector<8x8xf32>
    %98 = tpu.matmul %97, %82, %cst_33 {dimension_numbers = #tpu.dot_dimension_numbers<[1], [0], [0], [1], [0, 0, 1, 1], [], []>} : vector<8x8xf32>, vector<8x8xf32>, vector<8x8xf32> -> vector<8x8xf32>
    %c0_34 = arith.constant 0 : index
    %c24 = arith.constant 24 : index
    %99 = vector.load %arg10[%c0_34, %c24] : memref<16x32xf32, #tpu.memory_space<vmem>>, vector<8x8xf32>
    tpu.vector_store %arg10[%c0_34, %c24], %98 {strides = array<i32>} : memref<16x32xf32, #tpu.memory_space<vmem>>, vector<8x8xf32>,
    %c1 = arith.constant 1 : index
    %c0_35 = arith.constant 0 : index
    %100 = vector.load %arg2[%c1, %c0_35] : memref<2x8xf32, #tpu.memory_space<vmem>>, vector<1x8xf32>
    %101 = vector.extract_strided_slice %18 {offsets = [8, 0], sizes = [8, 8], strides = [1, 1]} : vector<16x96xf32> to vector<8x8xf32>
    %102 = vector.extract_strided_slice %18 {offsets = [8, 32], sizes = [8, 8], strides = [1, 1]} : vector<16x96xf32> to vector<8x8xf32>
    %103 = vector.extract_strided_slice %18 {offsets = [8, 64], sizes = [8, 8], strides = [1, 1]} : vector<16x96xf32> to vector<8x8xf32>
    %cst_36 = arith.constant dense<0.000000e+00> : vector<8x8xf32>
    %104 = tpu.matmul %101, %102, %cst_36 {dimension_numbers = #tpu.dot_dimension_numbers<[1], [1], [0], [0], [0, 0, 1, 0], [], []>} : vector<8x8xf32>, vector<8x8xf32>, vector<8x8xf32> -> vector<8x8xf32>
    %cst_37 = arith.constant 0.353553385 : f32
    %105 = vector.broadcast %cst_37 : f32 to vector<8x8xf32>
    %106 = arith.mulf %104, %105 : vector<8x8xf32>
    %107 = vector.broadcast %100 : vector<1x8xf32> to vector<8x8xf32>
    %108 = arith.addf %106, %107 : vector<8x8xf32>
    %cst_38 = arith.constant dense<0xFF800000> : vector<8xf32>
    %109 = vector.multi_reduction <maximumf>, %108, %cst_38 [1] : vector<8x8xf32> to vector<8xf32>
    %110 = vector.shape_cast %109 : vector<8xf32> to vector<8x1xf32>
    %111 = vector.broadcast %110 : vector<8x1xf32> to vector<8x8xf32>
    %112 = arith.subf %108, %111 : vector<8x8xf32>
    %113 = math.exp %112 : vector<8x8xf32>
    %cst_39 = arith.constant dense<0.000000e+00> : vector<8xf32>
    %114 = vector.multi_reduction <add>, %113, %cst_39 [1] : vector<8x8xf32> to vector<8xf32>
    %115 = vector.shape_cast %114 : vector<8xf32> to vector<8x1xf32>
    %116 = tpu.reciprocal %115 {approx = true} : vector<8x1xf32> -> vector<8x1xf32>
    %117 = vector.broadcast %116 : vector<8x1xf32> to vector<8x8xf32>
    %118 = arith.mulf %113, %117 : vector<8x8xf32>
    %cst_40 = arith.constant dense<0.000000e+00> : vector<8x8xf32>
    %119 = tpu.matmul %118, %103, %cst_40 {dimension_numbers = #tpu.dot_dimension_numbers<[1], [0], [0], [1], [0, 0, 1, 1], [], []>} : vector<8x8xf32>, vector<8x8xf32>, vector<8x8xf32> -> vector<8x8xf32>
    %c8_41 = arith.constant 8 : index
    %c0_42 = arith.constant 0 : index
    %120 = vector.load %arg10[%c8_41, %c0_42] : memref<16x32xf32, #tpu.memory_space<vmem>>, vector<8x8xf32>
    tpu.vector_store %arg10[%c8_41, %c0_42], %119 {strides = array<i32>} : memref<16x32xf32, #tpu.memory_space<vmem>>, vector<8x8xf32>,
    %121 = vector.extract_strided_slice %18 {offsets = [8, 8], sizes = [8, 8], strides = [1, 1]} : vector<16x96xf32> to vector<8x8xf32>
    %122 = vector.extract_strided_slice %18 {offsets = [8, 40], sizes = [8, 8], strides = [1, 1]} : vector<16x96xf32> to vector<8x8xf32>
    %123 = vector.extract_strided_slice %18 {offsets = [8, 72], sizes = [8, 8], strides = [1, 1]} : vector<16x96xf32> to vector<8x8xf32>
    %cst_43 = arith.constant dense<0.000000e+00> : vector<8x8xf32>
    %124 = tpu.matmul %121, %122, %cst_43 {dimension_numbers = #tpu.dot_dimension_numbers<[1], [1], [0], [0], [0, 0, 1, 0], [], []>} : vector<8x8xf32>, vector<8x8xf32>, vector<8x8xf32> -> vector<8x8xf32>
    %cst_44 = arith.constant 0.353553385 : f32
    %125 = vector.broadcast %cst_44 : f32 to vector<8x8xf32>
    %126 = arith.mulf %124, %125 : vector<8x8xf32>
    %127 = vector.broadcast %100 : vector<1x8xf32> to vector<8x8xf32>
    %128 = arith.addf %126, %127 : vector<8x8xf32>
    %cst_45 = arith.constant dense<0xFF800000> : vector<8xf32>
    %129 = vector.multi_reduction <maximumf>, %128, %cst_45 [1] : vector<8x8xf32> to vector<8xf32>
    %130 = vector.shape_cast %129 : vector<8xf32> to vector<8x1xf32>
    %131 = vector.broadcast %130 : vector<8x1xf32> to vector<8x8xf32>
    %132 = arith.subf %128, %131 : vector<8x8xf32>
    %133 = math.exp %132 : vector<8x8xf32>
    %cst_46 = arith.constant dense<0.000000e+00> : vector<8xf32>
    %134 = vector.multi_reduction <add>, %133, %cst_46 [1] : vector<8x8xf32> to vector<8xf32>
    %135 = vector.shape_cast %134 : vector<8xf32> to vector<8x1xf32>
    %136 = tpu.reciprocal %135 {approx = true} : vector<8x1xf32> -> vector<8x1xf32>
    %137 = vector.broadcast %136 : vector<8x1xf32> to vector<8x8xf32>
    %138 = arith.mulf %133, %137 : vector<8x8xf32>
    %cst_47 = arith.constant dense<0.000000e+00> : vector<8x8xf32>
    %139 = tpu.matmul %138, %123, %cst_47 {dimension_numbers = #tpu.dot_dimension_numbers<[1], [0], [0], [1], [0, 0, 1, 1], [], []>} : vector<8x8xf32>, vector<8x8xf32>, vector<8x8xf32> -> vector<8x8xf32>
    %c8_48 = arith.constant 8 : index
    %c8_49 = arith.constant 8 : index
    %140 = vector.load %arg10[%c8_48, %c8_49] : memref<16x32xf32, #tpu.memory_space<vmem>>, vector<8x8xf32>
    tpu.vector_store %arg10[%c8_48, %c8_49], %139 {strides = array<i32>} : memref<16x32xf32, #tpu.memory_space<vmem>>, vector<8x8xf32>,
    %141 = vector.extract_strided_slice %18 {offsets = [8, 16], sizes = [8, 8], strides = [1, 1]} : vector<16x96xf32> to vector<8x8xf32>
    %142 = vector.extract_strided_slice %18 {offsets = [8, 48], sizes = [8, 8], strides = [1, 1]} : vector<16x96xf32> to vector<8x8xf32>
    %143 = vector.extract_strided_slice %18 {offsets = [8, 80], sizes = [8, 8], strides = [1, 1]} : vector<16x96xf32> to vector<8x8xf32>
    %cst_50 = arith.constant dense<0.000000e+00> : vector<8x8xf32>
    %144 = tpu.matmul %141, %142, %cst_50 {dimension_numbers = #tpu.dot_dimension_numbers<[1], [1], [0], [0], [0, 0, 1, 0], [], []>} : vector<8x8xf32>, vector<8x8xf32>, vector<8x8xf32> -> vector<8x8xf32>
    %cst_51 = arith.constant 0.353553385 : f32
    %145 = vector.broadcast %cst_51 : f32 to vector<8x8xf32>
    %146 = arith.mulf %144, %145 : vector<8x8xf32>
    %147 = vector.broadcast %100 : vector<1x8xf32> to vector<8x8xf32>
    %148 = arith.addf %146, %147 : vector<8x8xf32>
    %cst_52 = arith.constant dense<0xFF800000> : vector<8xf32>
    %149 = vector.multi_reduction <maximumf>, %148, %cst_52 [1] : vector<8x8xf32> to vector<8xf32>
    %150 = vector.shape_cast %149 : vector<8xf32> to vector<8x1xf32>
    %151 = vector.broadcast %150 : vector<8x1xf32> to vector<8x8xf32>
    %152 = arith.subf %148, %151 : vector<8x8xf32>
    %153 = math.exp %152 : vector<8x8xf32>
    %cst_53 = arith.constant dense<0.000000e+00> : vector<8xf32>
    %154 = vector.multi_reduction <add>, %153, %cst_53 [1] : vector<8x8xf32> to vector<8xf32>
    %155 = vector.shape_cast %154 : vector<8xf32> to vector<8x1xf32>
    %156 = tpu.reciprocal %155 {approx = true} : vector<8x1xf32> -> vector<8x1xf32>
    %157 = vector.broadcast %156 : vector<8x1xf32> to vector<8x8xf32>
    %158 = arith.mulf %153, %157 : vector<8x8xf32>
    %cst_54 = arith.constant dense<0.000000e+00> : vector<8x8xf32>
    %159 = tpu.matmul %158, %143, %cst_54 {dimension_numbers = #tpu.dot_dimension_numbers<[1], [0], [0], [1], [0, 0, 1, 1], [], []>} : vector<8x8xf32>, vector<8x8xf32>, vector<8x8xf32> -> vector<8x8xf32>
    %c8_55 = arith.constant 8 : index
    %c16_56 = arith.constant 16 : index
    %160 = vector.load %arg10[%c8_55, %c16_56] : memref<16x32xf32, #tpu.memory_space<vmem>>, vector<8x8xf32>
    tpu.vector_store %arg10[%c8_55, %c16_56], %159 {strides = array<i32>} : memref<16x32xf32, #tpu.memory_space<vmem>>, vector<8x8xf32>,
    %161 = vector.extract_strided_slice %18 {offsets = [8, 24], sizes = [8, 8], strides = [1, 1]} : vector<16x96xf32> to vector<8x8xf32>
    %162 = vector.extract_strided_slice %18 {offsets = [8, 56], sizes = [8, 8], strides = [1, 1]} : vector<16x96xf32> to vector<8x8xf32>
    %163 = vector.extract_strided_slice %18 {offsets = [8, 88], sizes = [8, 8], strides = [1, 1]} : vector<16x96xf32> to vector<8x8xf32>
    %cst_57 = arith.constant dense<0.000000e+00> : vector<8x8xf32>
    %164 = tpu.matmul %161, %162, %cst_57 {dimension_numbers = #tpu.dot_dimension_numbers<[1], [1], [0], [0], [0, 0, 1, 0], [], []>} : vector<8x8xf32>, vector<8x8xf32>, vector<8x8xf32> -> vector<8x8xf32>
    %cst_58 = arith.constant 0.353553385 : f32
    %165 = vector.broadcast %cst_58 : f32 to vector<8x8xf32>
    %166 = arith.mulf %164, %165 : vector<8x8xf32>
    %167 = vector.broadcast %100 : vector<1x8xf32> to vector<8x8xf32>
    %168 = arith.addf %166, %167 : vector<8x8xf32>
    %cst_59 = arith.constant dense<0xFF800000> : vector<8xf32>
    %169 = vector.multi_reduction <maximumf>, %168, %cst_59 [1] : vector<8x8xf32> to vector<8xf32>
    %170 = vector.shape_cast %169 : vector<8xf32> to vector<8x1xf32>
    %171 = vector.broadcast %170 : vector<8x1xf32> to vector<8x8xf32>
    %172 = arith.subf %168, %171 : vector<8x8xf32>
    %173 = math.exp %172 : vector<8x8xf32>
    %cst_60 = arith.constant dense<0.000000e+00> : vector<8xf32>
    %174 = vector.multi_reduction <add>, %173, %cst_60 [1] : vector<8x8xf32> to vector<8xf32>
    %175 = vector.shape_cast %174 : vector<8xf32> to vector<8x1xf32>
    %176 = tpu.reciprocal %175 {approx = true} : vector<8x1xf32> -> vector<8x1xf32>
    %177 = vector.broadcast %176 : vector<8x1xf32> to vector<8x8xf32>
    %178 = arith.mulf %173, %177 : vector<8x8xf32>
    %cst_61 = arith.constant dense<0.000000e+00> : vector<8x8xf32>
    %179 = tpu.matmul %178, %163, %cst_61 {dimension_numbers = #tpu.dot_dimension_numbers<[1], [0], [0], [1], [0, 0, 1, 1], [], []>} : vector<8x8xf32>, vector<8x8xf32>, vector<8x8xf32> -> vector<8x8xf32>
    %c8_62 = arith.constant 8 : index
    %c24_63 = arith.constant 24 : index
    %180 = vector.load %arg10[%c8_62, %c24_63] : memref<16x32xf32, #tpu.memory_space<vmem>>, vector<8x8xf32>
    tpu.vector_store %arg10[%c8_62, %c24_63], %179 {strides = array<i32>} : memref<16x32xf32, #tpu.memory_space<vmem>>, vector<8x8xf32>,
    %c0_64 = arith.constant 0 : index
    %c0_65 = arith.constant 0 : index
    %181 = vector.load %arg10[%c0_64, %c0_65] : memref<16x32xf32, #tpu.memory_space<vmem>>, vector<16x32xf32>
    %c0_66 = arith.constant 0 : index
    %c0_67 = arith.constant 0 : index
    %c0_68 = arith.constant 0 : index
    %182 = vector.load %arg4[%c0_66, %c0_67, %c0_68] : memref<1x32x32xf32, #tpu.memory_space<vmem>>, vector<1x32x32xf32>
    %183 = vector.shape_cast %182 : vector<1x32x32xf32> to vector<32x32xf32>
    %cst_69 = arith.constant dense<0.000000e+00> : vector<16x32xf32>
    %184 = tpu.matmul %181, %183, %cst_69 {dimension_numbers = #tpu.dot_dimension_numbers<[1], [0], [0], [1], [0, 0, 1, 1], [], []>} : vector<16x32xf32>, vector<32x32xf32>, vector<16x32xf32> -> vector<16x32xf32>
    %185 = vector.broadcast %7 : vector<1x32xf32> to vector<16x32xf32>
    %186 = arith.addf %184, %185 : vector<16x32xf32>
    %187 = arith.addf %186, %3 : vector<16x32xf32>
    %cst_70 = arith.constant dense<0.000000e+00> : vector<16xf32>
    %188 = vector.multi_reduction <add>, %187, %cst_70 [1] : vector<16x32xf32> to vector<16xf32>
    %189 = vector.shape_cast %188 : vector<16xf32> to vector<16x1xf32>
    %cst_71 = arith.constant 3.200000e+01 : f32
    %190 = vector.broadcast %cst_71 : f32 to vector<16x1xf32>
    %191 = arith.divf %189, %190 : vector<16x1xf32>
    %192 = vector.broadcast %191 : vector<16x1xf32> to vector<16x32xf32>
    %193 = arith.subf %187, %192 : vector<16x32xf32>
    %194 = arith.mulf %193, %193 : vector<16x32xf32>
    %cst_72 = arith.constant dense<0.000000e+00> : vector<16xf32>
    %195 = vector.multi_reduction <add>, %194, %cst_72 [1] : vector<16x32xf32> to vector<16xf32>
    %196 = vector.shape_cast %195 : vector<16xf32> to vector<16x1xf32>
    %cst_73 = arith.constant 3.200000e+01 : f32
    %197 = vector.broadcast %cst_73 : f32 to vector<16x1xf32>
    %198 = arith.divf %196, %197 : vector<16x1xf32>
    %199 = vector.broadcast %191 : vector<16x1xf32> to vector<16x32xf32>
    %200 = arith.subf %187, %199 : vector<16x32xf32>
    %cst_74 = arith.constant 9.99999996E-13 : f32
    %201 = vector.broadcast %cst_74 : f32 to vector<16x1xf32>
    %202 = arith.addf %198, %201 : vector<16x1xf32>
    %203 = math.rsqrt %202 : vector<16x1xf32>
    %204 = vector.broadcast %203 : vector<16x1xf32> to vector<16x32xf32>
    %205 = arith.mulf %200, %204 : vector<16x32xf32>
    %206 = vector.broadcast %8 : vector<1x32xf32> to vector<16x32xf32>
    %207 = arith.mulf %205, %206 : vector<16x32xf32>
    %208 = vector.broadcast %9 : vector<1x32xf32> to vector<16x32xf32>
    %209 = arith.addf %207, %208 : vector<16x32xf32>
    %c0_75 = arith.constant 0 : index
    %c0_76 = arith.constant 0 : index
    %c0_77 = arith.constant 0 : index
    %210 = vector.load %arg5[%c0_75, %c0_76, %c0_77] : memref<1x32x128xf32, #tpu.memory_space<vmem>>, vector<1x32x128xf32>
    %211 = vector.shape_cast %210 : vector<1x32x128xf32> to vector<32x128xf32>
    %cst_78 = arith.constant dense<0.000000e+00> : vector<16x128xf32>
    %212 = tpu.matmul %209, %211, %cst_78 {dimension_numbers = #tpu.dot_dimension_numbers<[1], [0], [0], [1], [0, 0, 1, 1], [], []>} : vector<16x32xf32>, vector<32x128xf32>, vector<16x128xf32> -> vector<16x128xf32>
    %213 = vector.broadcast %10 : vector<1x128xf32> to vector<16x128xf32>
    %214 = arith.addf %212, %213 : vector<16x128xf32>
    %215 = arith.mulf %214, %214 : vector<16x128xf32>
    %216 = arith.mulf %214, %215 : vector<16x128xf32>
    %cst_79 = arith.constant 4.471500e-02 : f32
    %217 = vector.broadcast %cst_79 : f32 to vector<16x128xf32>
    %218 = arith.mulf %217, %216 : vector<16x128xf32>
    %219 = arith.addf %214, %218 : vector<16x128xf32>
    %cst_80 = arith.constant 0.797884583 : f32
    %220 = vector.broadcast %cst_80 : f32 to vector<16x128xf32>
    %221 = arith.mulf %220, %219 : vector<16x128xf32>
    %222 = math.tanh %221 : vector<16x128xf32>
    %cst_81 = arith.constant 1.000000e+00 : f32
    %223 = vector.broadcast %cst_81 : f32 to vector<16x128xf32>
    %224 = arith.addf %223, %222 : vector<16x128xf32>
    %cst_82 = arith.constant 5.000000e-01 : f32
    %225 = vector.broadcast %cst_82 : f32 to vector<16x128xf32>
    %226 = arith.mulf %225, %224 : vector<16x128xf32>
    %227 = arith.mulf %214, %226 : vector<16x128xf32>
    %c0_83 = arith.constant 0 : index
    %c0_84 = arith.constant 0 : index
    %c0_85 = arith.constant 0 : index
    %228 = vector.load %arg6[%c0_83, %c0_84, %c0_85] : memref<1x128x32xf32, #tpu.memory_space<vmem>>, vector<1x128x32xf32>
    %229 = vector.shape_cast %228 : vector<1x128x32xf32> to vector<128x32xf32>
    %cst_86 = arith.constant dense<0.000000e+00> : vector<16x32xf32>
    %230 = tpu.matmul %227, %229, %cst_86 {dimension_numbers = #tpu.dot_dimension_numbers<[1], [0], [0], [1], [0, 0, 1, 1], [], []>} : vector<16x128xf32>, vector<128x32xf32>, vector<16x32xf32> -> vector<16x32xf32>
    %231 = vector.broadcast %11 : vector<1x32xf32> to vector<16x32xf32>
    %232 = arith.addf %230, %231 : vector<16x32xf32>
    %233 = arith.addf %232, %209 : vector<16x32xf32>
    %cst_87 = arith.constant dense<0.000000e+00> : vector<16xf32>
    %234 = vector.multi_reduction <add>, %233, %cst_87 [1] : vector<16x32xf32> to vector<16xf32>
    %235 = vector.shape_cast %234 : vector<16xf32> to vector<16x1xf32>
    %cst_88 = arith.constant 3.200000e+01 : f32
    %236 = vector.broadcast %cst_88 : f32 to vector<16x1xf32>
    %237 = arith.divf %235, %236 : vector<16x1xf32>
    %238 = vector.broadcast %237 : vector<16x1xf32> to vector<16x32xf32>
    %239 = arith.subf %233, %238 : vector<16x32xf32>
    %240 = arith.mulf %239, %239 : vector<16x32xf32>
    %cst_89 = arith.constant dense<0.000000e+00> : vector<16xf32>
    %241 = vector.multi_reduction <add>, %240, %cst_89 [1] : vector<16x32xf32> to vector<16xf32>
    %242 = vector.shape_cast %241 : vector<16xf32> to vector<16x1xf32>
    %cst_90 = arith.constant 3.200000e+01 : f32
    %243 = vector.broadcast %cst_90 : f32 to vector<16x1xf32>
    %244 = arith.divf %242, %243 : vector<16x1xf32>
    %245 = vector.broadcast %237 : vector<16x1xf32> to vector<16x32xf32>
    %246 = arith.subf %233, %245 : vector<16x32xf32>
    %cst_91 = arith.constant 9.99999996E-13 : f32
    %247 = vector.broadcast %cst_91 : f32 to vector<16x1xf32>
    %248 = arith.addf %244, %247 : vector<16x1xf32>
    %249 = math.rsqrt %248 : vector<16x1xf32>
    %250 = vector.broadcast %249 : vector<16x1xf32> to vector<16x32xf32>
    %251 = arith.mulf %246, %250 : vector<16x32xf32>
    %252 = vector.broadcast %12 : vector<1x32xf32> to vector<16x32xf32>
    %253 = arith.mulf %251, %252 : vector<16x32xf32>
    %254 = vector.broadcast %13 : vector<1x32xf32> to vector<16x32xf32>
    %255 = arith.addf %253, %254 : vector<16x32xf32>
    %c0_92 = arith.constant 0 : index
    %c0_93 = arith.constant 0 : index
    %256 = vector.load %arg9[%c0_92, %c0_93] : memref<16x32xf32, #tpu.memory_space<vmem>>, vector<16x32xf32>
    tpu.vector_store %arg9[%c0_92, %c0_93], %255 {strides = array<i32>} : memref<16x32xf32, #tpu.memory_space<vmem>>, vector<16x32xf32>,
    %c0_94 = arith.constant 0 : index
    %c0_95 = arith.constant 0 : index
    %c0_96 = arith.constant 0 : index
    %257 = vector.load %arg8[%c0_94, %c0_95, %c0_96] : memref<1x16x32xf32, #tpu.memory_space<vmem>>, vector<1x16x32xf32>
    %258 = vector.shape_cast %257 : vector<1x16x32xf32> to vector<16x32xf32>
    %259 = vector.shape_cast %255 : vector<16x32xf32> to vector<1x16x32xf32>
    tpu.vector_store %arg8[%c0_94, %c0_95, %c0_96], %259 {strides = array<i32>} : memref<1x16x32xf32, #tpu.memory_space<vmem>>, vector<1x16x32xf32>,
    return
  }
  func.func @transform_0(%arg0: i32) -> (i32, i32) {
    %c0_i32 = arith.constant 0 : i32
    %c0_i32_0 = arith.constant 0 : i32
    %c0_i32_1 = arith.constant 0 : i32
    return %c0_i32, %c0_i32_0 : i32, i32
  }
  func.func @transform_1(%arg0: i32) -> (i32, i32) {
    %c0_i32 = arith.constant 0 : i32
    %c0_i32_0 = arith.constant 0 : i32
    %c0_i32_1 = arith.constant 0 : i32
    return %c0_i32, %c0_i32_0 : i32, i32
  }
  func.func @transform_2(%arg0: i32) -> (i32, i32, i32) {
    %c0_i32 = arith.constant 0 : i32
    %c0_i32_0 = arith.constant 0 : i32
    %c0_i32_1 = arith.constant 0 : i32
    return %arg0, %c0_i32, %c0_i32_0 : i32, i32, i32
  }
  func.func @transform_3(%arg0: i32) -> (i32, i32, i32) {
    %c0_i32 = arith.constant 0 : i32
    %c0_i32_0 = arith.constant 0 : i32
    %c0_i32_1 = arith.constant 0 : i32
    return %arg0, %c0_i32, %c0_i32_0 : i32, i32, i32
  }
  func.func @transform_4(%arg0: i32) -> (i32, i32, i32) {
    %c0_i32 = arith.constant 0 : i32
    %c0_i32_0 = arith.constant 0 : i32
    %c0_i32_1 = arith.constant 0 : i32
    return %arg0, %c0_i32, %c0_i32_0 : i32, i32, i32
  }
  func.func @transform_5(%arg0: i32) -> (i32, i32, i32) {
    %c0_i32 = arith.constant 0 : i32
    %c0_i32_0 = arith.constant 0 : i32
    %c0_i32_1 = arith.constant 0 : i32
    return %arg0, %c0_i32, %c0_i32_0 : i32, i32, i32
  }
  func.func @transform_6(%arg0: i32) -> (i32, i32, i32) {
    %c0_i32 = arith.constant 0 : i32
    %c0_i32_0 = arith.constant 0 : i32
    %c0_i32_1 = arith.constant 0 : i32
    return %arg0, %c0_i32, %c0_i32_0 : i32, i32, i32
  }
  func.func @transform_7(%arg0: i32) -> (i32, i32, i32) {
    %c0_i32 = arith.constant 0 : i32
    %c0_i32_0 = arith.constant 0 : i32
    %c0_i32_1 = arith.constant 0 : i32
    return %arg0, %c0_i32, %c0_i32_0 : i32, i32, i32
  }
}

</mosaic_0001>

<llo_original>
// kernel: transformer_layer_forward.1
$region0: #{transformer_layer_forward.1}
  #allocation0 [shape = 'u32[]', space=smem, size = 0x4, offset = 0x4, fixed_abs, tag = 'smem constant byte address 0x4 - core index']
  #allocation1 [shape = 'u32[144,128]{1,0:T(1,128)}', space=vmem, size = 0x12000, scoped, tag = 'internal scratch']
  #allocation2 [shape = 'f32[16,32]{1,0:T(8,128)}', space=vmem, size = 0x2000, scoped, tag = 'scratch operand']
  #allocation3 [shape = 'f32[16,32]{1,0:T(8,128)}', space=vmem, size = 0x2000, scoped, tag = 'scratch operand']
  %s0 = inlined_call_operand.vmem [shape: f32[16,32], index: 0, kind: input, shape index: {}]
  %s1 = inlined_call_operand.vmem [shape: f32[2,8], index: 1, kind: input, shape index: {}]
  %s2 = inlined_call_operand.vmem [shape: f32[2,32,96], index: 2, kind: input, shape index: {}]
  %s3 = inlined_call_operand.vmem [shape: f32[2,32,32], index: 3, kind: input, shape index: {}]
  %s4 = inlined_call_operand.vmem [shape: f32[2,32,128], index: 4, kind: input, shape index: {}]
  %s5 = inlined_call_operand.vmem [shape: f32[2,128,32], index: 5, kind: input, shape index: {}]
  %s6 = inlined_call_operand.vmem [shape: f32[2,8,128], index: 6, kind: input, shape index: {}]
  %s7 = inlined_call_operand.vmem [shape: f32[2,16,32], index: 7, kind: output, shape index: {}]
  %s8 = sld [smem:[#allocation0]]
  $region65: #{transformer_layer_forward.1} parent=0
    _
  %s10 = ssub.s32 1, %s8
  %s11 = scalar_select 0, %s10, %s8
  loop: start=0, step=1, limit=4
  $region2: #{transformer_layer_forward.1} parent=0 // loop_pre_header
    _
  $region3: #{transformer_layer_forward.1} parent=0 // loop_header
    %s13 = sphi 0, %s17
    %p14 = scmp.ge.s32.totalorder %s13, 4
    %s21 = sphi 0, %s21
    %s23 = sphi 0, %s21
    %s24 = sphi 0, %s23
    %s38 = sphi 0, %s24
    %s42 = sphi 0, %s42
    %s44 = sphi 0, %s42
    %s45 = sphi 0, %s44
    %s59 = sphi 0, %s45
    %s65 = sphi 0, %s67
    %s68 = sphi 0, %s65
    %s69 = sphi 0, %s68
    %s85 = sphi 0, %s69
    %s91 = sphi 0, %s93
    %s94 = sphi 0, %s91
    %s95 = sphi 0, %s94
    %s111 = sphi 0, %s95
    %s117 = sphi 0, %s119
    %s120 = sphi 0, %s117
    %s121 = sphi 0, %s120
    %s137 = sphi 0, %s121
    %s143 = sphi 0, %s145
    %s146 = sphi 0, %s143
    %s147 = sphi 0, %s146
    %s163 = sphi 0, %s147
    %s169 = sphi 0, %s171
    %s172 = sphi 0, %s169
    %s173 = sphi 0, %s172
    %s189 = sphi 0, %s173
    %s195 = sphi 0, %s197
    %s198 = sphi 0, %s195
    %s199 = sphi 0, %s198
    %s215 = sphi 0, %s199
  $region4: #{transformer_layer_forward.1} parent=0 // loop_header_branch
    %16 = sbr.rel (%p14) target = $region8
  $region5: #{transformer_layer_forward.1} parent=0 // loop_body
    %s18 = ssub.s32 %s13, 1
    %s19 = ssub.s32 %s13, 2
    %s20 = sadd.s32 %s13, 1
    %s22 = sadd.s32 %s21, 1
    %p25 = scmp.eq.s32.totalorder %s13, 1
    %p26 = scmp.ne.s32.totalorder %s21, %s23
    %p27 = scmp.eq.s32.totalorder %s13, 0
    %p28 = por %p26, %p27
    %p29 = scmp.ne.s32.totalorder %s21, %s23
    %p30 = scmp.eq.s32.totalorder %s18, 1
    %p31 = por %p29, %p30
    %p32 = scmp.ne.s32.totalorder %s23, %s24
    %p33 = scmp.eq.s32.totalorder %s18, 0
    %p34 = por %p32, %p33
    %p35 = scmp.ne.s32.totalorder %s23, %s24
    %p36 = scmp.eq.s32.totalorder %s19, 1
    %p37 = por %p35, %p36
    %p39 = scmp.ne.s32.totalorder %s24, %s38
    %p40 = scmp.eq.s32.totalorder %s19, 0
    %p41 = por %p39, %p40
    %s43 = sadd.s32 %s42, 1
    %p46 = scmp.eq.s32.totalorder %s13, 1
    %p47 = scmp.ne.s32.totalorder %s42, %s44
    %p48 = scmp.eq.s32.totalorder %s13, 0
    %p49 = por %p47, %p48
    %p50 = scmp.ne.s32.totalorder %s42, %s44
    %p51 = scmp.eq.s32.totalorder %s18, 1
    %p52 = por %p50, %p51
    %p53 = scmp.ne.s32.totalorder %s44, %s45
    %p54 = scmp.eq.s32.totalorder %s18, 0
    %p55 = por %p53, %p54
    %p56 = scmp.ne.s32.totalorder %s44, %s45
    %p57 = scmp.eq.s32.totalorder %s19, 1
    %p58 = por %p56, %p57
    %p60 = scmp.ne.s32.totalorder %s45, %s59
    %p61 = scmp.eq.s32.totalorder %s19, 0
    %p62 = por %p60, %p61
    %s63 = ssub.s32 %s13, %s20
    %p64 = scmp.eq.s32.totalorder %s63, 0
    %s66 = sadd.s32 %s65, 1
    %s67 = scalar_select %p64, %s65, %s66
    %p70 = pneg %p64
    %p71 = scmp.eq.s32.totalorder %s13, 1
    %p72 = por %p70, %p71
    %p73 = scmp.ne.s32.totalorder %s65, %s68
    %p74 = scmp.eq.s32.totalorder %s13, 0
    %p75 = por %p73, %p74
    %p76 = scmp.ne.s32.totalorder %s65, %s68
    %p77 = scmp.eq.s32.totalorder %s18, 1
    %p78 = por %p76, %p77
    %p79 = scmp.ne.s32.totalorder %s68, %s69
    %p80 = scmp.eq.s32.totalorder %s18, 0
    %p81 = por %p79, %p80
    %p82 = scmp.ne.s32.totalorder %s68, %s69
    %p83 = scmp.eq.s32.totalorder %s19, 1
    %p84 = por %p82, %p83
    %p86 = scmp.ne.s32.totalorder %s69, %s85
    %p87 = scmp.eq.s32.totalorder %s19, 0
    %p88 = por %p86, %p87
    %s89 = ssub.s32 %s13, %s20
    %p90 = scmp.eq.s32.totalorder %s89, 0
    %s92 = sadd.s32 %s91, 1
    %s93 = scalar_select %p90, %s91, %s92
    %p96 = pneg %p90
    %p97 = scmp.eq.s32.totalorder %s13, 1
    %p98 = por %p96, %p97
    %p99 = scmp.ne.s32.totalorder %s91, %s94
    %p100 = scmp.eq.s32.totalorder %s13, 0
    %p101 = por %p99, %p100
    %p102 = scmp.ne.s32.totalorder %s91, %s94
    %p103 = scmp.eq.s32.totalorder %s18, 1
    %p104 = por %p102, %p103
    %p105 = scmp.ne.s32.totalorder %s94, %s95
    %p106 = scmp.eq.s32.totalorder %s18, 0
    %p107 = por %p105, %p106
    %p108 = scmp.ne.s32.totalorder %s94, %s95
    %p109 = scmp.eq.s32.totalorder %s19, 1
    %p110 = por %p108, %p109
    %p112 = scmp.ne.s32.totalorder %s95, %s111
    %p113 = scmp.eq.s32.totalorder %s19, 0
    %p114 = por %p112, %p113
    %s115 = ssub.s32 %s13, %s20
    %p116 = scmp.eq.s32.totalorder %s115, 0
    %s118 = sadd.s32 %s117, 1
    %s119 = scalar_select %p116, %s117, %s118
    %p122 = pneg %p116
    %p123 = scmp.eq.s32.totalorder %s13, 1
    %p124 = por %p122, %p123
    %p125 = scmp.ne.s32.totalorder %s117, %s120
    %p126 = scmp.eq.s32.totalorder %s13, 0
    %p127 = por %p125, %p126
    %p128 = scmp.ne.s32.totalorder %s117, %s120
    %p129 = scmp.eq.s32.totalorder %s18, 1
    %p130 = por %p128, %p129
    %p131 = scmp.ne.s32.totalorder %s120, %s121
    %p132 = scmp.eq.s32.totalorder %s18, 0
    %p133 = por %p131, %p132
    %p134 = scmp.ne.s32.totalorder %s120, %s121
    %p135 = scmp.eq.s32.totalorder %s19, 1
    %p136 = por %p134, %p135
    %p138 = scmp.ne.s32.totalorder %s121, %s137
    %p139 = scmp.eq.s32.totalorder %s19, 0
    %p140 = por %p138, %p139
    %s141 = ssub.s32 %s13, %s20
    %p142 = scmp.eq.s32.totalorder %s141, 0
    %s144 = sadd.s32 %s143, 1
    %s145 = scalar_select %p142, %s143, %s144
    %p148 = pneg %p142
    %p149 = scmp.eq.s32.totalorder %s13, 1
    %p150 = por %p148, %p149
    %p151 = scmp.ne.s32.totalorder %s143, %s146
    %p152 = scmp.eq.s32.totalorder %s13, 0
    %p153 = por %p151, %p152
    %p154 = scmp.ne.s32.totalorder %s143, %s146
    %p155 = scmp.eq.s32.totalorder %s18, 1
    %p156 = por %p154, %p155
    %p157 = scmp.ne.s32.totalorder %s146, %s147
    %p158 = scmp.eq.s32.totalorder %s18, 0
    %p159 = por %p157, %p158
    %p160 = scmp.ne.s32.totalorder %s146, %s147
    %p161 = scmp.eq.s32.totalorder %s19, 1
    %p162 = por %p160, %p161
    %p164 = scmp.ne.s32.totalorder %s147, %s163
    %p165 = scmp.eq.s32.totalorder %s19, 0
    %p166 = por %p164, %p165
    %s167 = ssub.s32 %s13, %s20
    %p168 = scmp.eq.s32.totalorder %s167, 0
    %s170 = sadd.s32 %s169, 1
    %s171 = scalar_select %p168, %s169, %s170
    %p174 = pneg %p168
    %p175 = scmp.eq.s32.totalorder %s13, 1
    %p176 = por %p174, %p175
    %p177 = scmp.ne.s32.totalorder %s169, %s172
    %p178 = scmp.eq.s32.totalorder %s13, 0
    %p179 = por %p177, %p178
    %p180 = scmp.ne.s32.totalorder %s169, %s172
    %p181 = scmp.eq.s32.totalorder %s18, 1
    %p182 = por %p180, %p181
    %p183 = scmp.ne.s32.totalorder %s172, %s173
    %p184 = scmp.eq.s32.totalorder %s18, 0
    %p185 = por %p183, %p184
    %p186 = scmp.ne.s32.totalorder %s172, %s173
    %p187 = scmp.eq.s32.totalorder %s19, 1
    %p188 = por %p186, %p187
    %p190 = scmp.ne.s32.totalorder %s173, %s189
    %p191 = scmp.eq.s32.totalorder %s19, 0
    %p192 = por %p190, %p191
    %s193 = ssub.s32 %s13, %s20
    %p194 = scmp.eq.s32.totalorder %s193, 0
    %s196 = sadd.s32 %s195, 1
    %s197 = scalar_select %p194, %s195, %s196
    %p200 = pneg %p194
    %p201 = scmp.eq.s32.totalorder %s13, 1
    %p202 = por %p200, %p201
    %p203 = scmp.ne.s32.totalorder %s195, %s198
    %p204 = scmp.eq.s32.totalorder %s13, 0
    %p205 = por %p203, %p204
    %p206 = scmp.ne.s32.totalorder %s195, %s198
    %p207 = scmp.eq.s32.totalorder %s18, 1
    %p208 = por %p206, %p207
    %p209 = scmp.ne.s32.totalorder %s198, %s199
    %p210 = scmp.eq.s32.totalorder %s18, 0
    %p211 = por %p209, %p210
    %p212 = scmp.ne.s32.totalorder %s198, %s199
    %p213 = scmp.eq.s32.totalorder %s19, 1
    %p214 = por %p212, %p213
    %p216 = scmp.ne.s32.totalorder %s199, %s215
    %p217 = scmp.eq.s32.totalorder %s19, 0
    %p218 = por %p216, %p217
    %p219 = scmp.le.s32.totalorder 1, %s13
    %p220 = scmp.lt.s32.totalorder %s13, 3
    %p221 = pnand %p219, %p220
    %p222 = pneg %p221
    // Predicated region
    $region9: #{transformer_layer_forward.1} parent=5 // pred_check
      _
    $region10: #{transformer_layer_forward.1} parent=5 // pred_check_branch
      %224 = sbr.rel (%p221) target = $region12
    $region11: #{transformer_layer_forward.1} parent=5 // pred_region
      %s225 = ssub.s32 %s13, 1
      // Predicated region
      $region13: #{transformer_layer_forward.1} parent=11 // pred_check
        %p226 = pneg %p34
      $region14: #{transformer_layer_forward.1} parent=11 // pred_check_branch
        %228 = sbr.rel (%p226) target = $region16
      $region15: #{transformer_layer_forward.1} parent=11 // pred_region
        _
      $region16: #{transformer_layer_forward.1} parent=11 // pred_fallthru
        _
      // Predicated region
      $region17: #{transformer_layer_forward.1} parent=11 // pred_check
        %p229 = pneg %p55
      $region18: #{transformer_layer_forward.1} parent=11 // pred_check_branch
        %231 = sbr.rel (%p229) target = $region20
      $region19: #{transformer_layer_forward.1} parent=11 // pred_region
        _
      $region20: #{transformer_layer_forward.1} parent=11 // pred_fallthru
        _
    $region12: #{transformer_layer_forward.1} parent=5 // pred_fallthru
      _
    %p232 = scmp.lt.s32.totalorder %s13, 2
    // Predicated region
    $region21: #{transformer_layer_forward.1} parent=5 // pred_check
      %p233 = pneg %p232
    $region22: #{transformer_layer_forward.1} parent=5 // pred_check_branch
      %235 = sbr.rel (%p233) target = $region24
    $region23: #{transformer_layer_forward.1} parent=5 // pred_region
      // Predicated region
      $region25: #{transformer_layer_forward.1} parent=23 // pred_check
        %p236 = pneg %p75
      $region26: #{transformer_layer_forward.1} parent=23 // pred_check_branch
        %238 = sbr.rel (%p236) target = $region28
      $region27: #{transformer_layer_forward.1} parent=23 // pred_region
        %p239 = scmp.lt.s32.totalorder %s13, 1
        %s240 = scalar_select %p239, %s13, 1
        %s241 = smul.addr %s240, 4
        %s242 = smul.addr %s241, 8
        %s243 = scalar_lea.vmem %s2, %s242
      $region28: #{transformer_layer_forward.1} parent=23 // pred_fallthru
        _
      // Predicated region
      $region29: #{transformer_layer_forward.1} parent=23 // pred_check
        %p244 = pneg %p101
      $region30: #{transformer_layer_forward.1} parent=23 // pred_check_branch
        %246 = sbr.rel (%p244) target = $region32
      $region31: #{transformer_layer_forward.1} parent=23 // pred_region
        %p247 = scmp.lt.s32.totalorder %s13, 1
        %s248 = scalar_select %p247, %s13, 1
        %s249 = smul.addr %s248, 4
        %s250 = smul.addr %s249, 8
        %s251 = scalar_lea.vmem %s3, %s250
      $region32: #{transformer_layer_forward.1} parent=23 // pred_fallthru
        _
      // Predicated region
      $region33: #{transformer_layer_forward.1} parent=23 // pred_check
        %p252 = pneg %p127
      $region34: #{transformer_layer_forward.1} parent=23 // pred_check_branch
        %254 = sbr.rel (%p252) target = $region36
      $region35: #{transformer_layer_forward.1} parent=23 // pred_region
        %p255 = scmp.lt.s32.totalorder %s13, 1
        %s256 = scalar_select %p255, %s13, 1
        %s257 = smul.addr %s256, 4
        %s258 = smul.addr %s257, 8
        %s259 = scalar_lea.vmem %s4, %s258
      $region36: #{transformer_layer_forward.1} parent=23 // pred_fallthru
        _
      // Predicated region
      $region37: #{transformer_layer_forward.1} parent=23 // pred_check
        %p260 = pneg %p153
      $region38: #{transformer_layer_forward.1} parent=23 // pred_check_branch
        %262 = sbr.rel (%p260) target = $region40
      $region39: #{transformer_layer_forward.1} parent=23 // pred_region
        %p263 = scmp.lt.s32.totalorder %s13, 1
        %s264 = scalar_select %p263, %s13, 1
        %s265 = smul.addr %s264, 16
        %s266 = smul.addr %s265, 8
        %s267 = scalar_lea.vmem %s5, %s266
      $region40: #{transformer_layer_forward.1} parent=23 // pred_fallthru
        _
      // Predicated region
      $region41: #{transformer_layer_forward.1} parent=23 // pred_check
        %p268 = pneg %p179
      $region42: #{transformer_layer_forward.1} parent=23 // pred_check_branch
        %270 = sbr.rel (%p268) target = $region44
      $region43: #{transformer_layer_forward.1} parent=23 // pred_region
        %p271 = scmp.lt.s32.totalorder %s13, 1
        %s272 = scalar_select %p271, %s13, 1
        %s273 = smul.addr %s272, 8
        %s274 = scalar_lea.vmem %s6, %s273
      $region44: #{transformer_layer_forward.1} parent=23 // pred_fallthru
        _
    $region24: #{transformer_layer_forward.1} parent=5 // pred_fallthru
      _
    %p275 = scmp.le.s32.totalorder 1, %s13
    %p276 = scmp.lt.s32.totalorder %s13, 3
    %p277 = pnand %p275, %p276
    %p278 = pneg %p277
    // Predicated region
    $region45: #{transformer_layer_forward.1} parent=5 // pred_check
      _
    $region46: #{transformer_layer_forward.1} parent=5 // pred_check_branch
      %280 = sbr.rel (%p277) target = $region48
    $region47: #{transformer_layer_forward.1} parent=5 // pred_region
      %s281 = ssub.s32 %s13, 1
      %p282 = pneg %p34
      %p283 = pneg %p31
      %p284 = pneg %p55
      %p285 = pneg %p52
      %p286 = scmp.lt.s32.totalorder %s18, 1
      %s287 = scalar_select %p286, %s18, 1
      %s288 = smul.addr %s287, 4
      %s289 = smul.addr %s288, 8
      %s290 = scalar_lea.vmem %s2, %s289
      %p291 = pneg %p81
      %p292 = pneg %p78
      %p293 = scmp.lt.s32.totalorder %s18, 1
      %s294 = scalar_select %p293, %s18, 1
      %s295 = smul.addr %s294, 4
      %s296 = smul.addr %s295, 8
      %s297 = scalar_lea.vmem %s3, %s296
      %p298 = pneg %p107
      %p299 = pneg %p104
      %p300 = scmp.lt.s32.totalorder %s18, 1
      %s301 = scalar_select %p300, %s18, 1
      %s302 = smul.addr %s301, 4
      %s303 = smul.addr %s302, 8
      %s304 = scalar_lea.vmem %s4, %s303
      %p305 = pneg %p133
      %p306 = pneg %p130
      %p307 = scmp.lt.s32.totalorder %s18, 1
      %s308 = scalar_select %p307, %s18, 1
      %s309 = smul.addr %s308, 16
      %s310 = smul.addr %s309, 8
      %s311 = scalar_lea.vmem %s5, %s310
      %p312 = pneg %p159
      %p313 = pneg %p156
      %p314 = scmp.lt.s32.totalorder %s18, 1
      %s315 = scalar_select %p314, %s18, 1
      %s316 = smul.addr %s315, 8
      %s317 = scalar_lea.vmem %s6, %s316
      %p318 = pneg %p185
      %p319 = pneg %p182
      %p320 = pneg %p211
      %p321 = pneg %p208
      %p322 = scmp.lt.s32.totalorder %s18, 1
      %s323 = scalar_select %p322, %s18, 1
      %s324 = smul.addr %s323, 2
      %s325 = smul.addr %s324, 8
      %s326 = scalar_lea.vmem %s7, %s325
      %p327 = scmp.lt.s32.totalorder %s18, 1
      %s328 = scalar_select %p327, %s18, 1
      %s329 = smul.addr %s328, 4
      %s330 = smul.addr %s329, 8
      %s331 = scalar_lea.vmem %s2, %s330
      %p332 = scmp.lt.s32.totalorder %s18, 1
      %s333 = scalar_select %p332, %s18, 1
      %s334 = smul.addr %s333, 4
      %s335 = smul.addr %s334, 8
      %s336 = scalar_lea.vmem %s3, %s335
      %p337 = scmp.lt.s32.totalorder %s18, 1
      %s338 = scalar_select %p337, %s18, 1
      %s339 = smul.addr %s338, 4
      %s340 = smul.addr %s339, 8
      %s341 = scalar_lea.vmem %s4, %s340
      %p342 = scmp.lt.s32.totalorder %s18, 1
      %s343 = scalar_select %p342, %s18, 1
      %s344 = smul.addr %s343, 16
      %s345 = smul.addr %s344, 8
      %s346 = scalar_lea.vmem %s5, %s345
      %p347 = scmp.lt.s32.totalorder %s18, 1
      %s348 = scalar_select %p347, %s18, 1
      %s349 = smul.addr %s348, 8
      %s350 = scalar_lea.vmem %s6, %s349
      %p351 = scmp.lt.s32.totalorder %s18, 1
      %s352 = scalar_select %p351, %s18, 1
      %s353 = smul.addr %s352, 2
      %s354 = smul.addr %s353, 8
      %s355 = scalar_lea.vmem %s7, %s354
      %p356 = scmp.eq.s32.totalorder %s18, 0
      // Predicated region
      $region49: #{transformer_layer_forward.1} parent=47 // pred_check
        %p357 = pneg %p356
      $region50: #{transformer_layer_forward.1} parent=47 // pred_check_branch
        %359 = sbr.rel (%p357) target = $region52
      $region51: #{transformer_layer_forward.1} parent=47 // pred_region
        %v360 = vld [vmem:[%s0] sm:$0xff]
        %v361 = vld [vmem:[%s0 + $0x8] sm:$0xff]
        %vm362 = vcmask 261120
        %363 = vst.msk [vmem:[#allocation2] sm:$0xff] %vm362, %v360
        %364 = vst.msk [vmem:[#allocation2 + $0x8] sm:$0xff] %vm362, %v361
      $region52: #{transformer_layer_forward.1} parent=47 // pred_fallthru
        _
      %v365 = vld [vmem:[#allocation2] sm:$0xff]
      %v366 = vld [vmem:[#allocation2 + $0x8] sm:$0xff]
      %v367 = vld [vmem:[%s350] sm:$0xff]
      %v368 = vld [vmem:[%s331] sm:$0xff]
      %v369 = vld [vmem:[%s331 + $0x8] sm:$0xff]
      %v370 = vld [vmem:[%s331 + $0x10] sm:$0xff]
      %v371 = vld [vmem:[%s331 + $0x18] sm:$0xff]
      %v372 = vlaneseq
      %v373 = vshrl.u32 %v372, 7
      %v374 = vsub.s32 0, %v373
      %v375 = vrot.slane %v367, %v374
      %vm376 = vcmask 261120
      %v378 = vsel %vm376, %v365, 0
      %v381 = vsel %vm376, %v366, 0
      %383 = vmatprep.subr.mxu0 0.0
      %384 = vmatpush1.msra.mxu0 %v368
      %385 = vmatprep.subr.mxu0 0.0
      %386 = vmatpush1.msra.mxu0 %v369
      %387 = vmatprep.subr.mxu0 0.0
      %388 = vmatpush1.msra.mxu0 %v370
      %389 = vmatprep.subr.mxu0 0.0
      %390 = vmatpush1.msra.mxu0 %v371
      %391 = vmatprep.subr.mxu0 0.0
      %392 = vmatpush1.msra.mxu0 0.0
      %393 = vmatprep.subr.mxu0 0.0
      %394 = vmatpush1.msra.mxu0 0.0
      %395 = vmatprep.subr.mxu0 0.0
      %396 = vmatpush1.msra.mxu0 0.0
      %397 = vmatprep.subr.mxu0 0.0
      %398 = vmatpush1.msra.mxu0 0.0
      %399 = vmatprep.subr.mxu0 0.0
      %400 = vmatpush1.msra.mxu0 0.0
      %401 = vmatprep.subr.mxu0 0.0
      %402 = vmatpush1.msra.mxu0 0.0
      %403 = vmatprep.subr.mxu0 0.0
      %404 = vmatpush1.msra.mxu0 0.0
      %405 = vmatprep.subr.mxu0 0.0
      %406 = vmatpush1.msra.mxu0 0.0
      %407 = vmatprep.subr.mxu0 0.0
      %408 = vmatpush1.msra.mxu0 0.0
      %409 = vmatprep.subr.mxu0 0.0
      %410 = vmatpush1.msra.mxu0 0.0
      %411 = vmatprep.subr.mxu0 0.0
      %412 = vmatpush1.msra.mxu0 0.0
      %413 = vmatprep.subr.mxu0 0.0
      %414 = vmatpush1.msra.mxu0 0.0
      %415 = vmatprep.subr.mxu0 0.0
      %416 = vmatpush1.msra.mxu0 0.0
      %417 = vmatprep.subr.mxu0 0.0
      %418 = vmatpush1.msra.mxu0 0.0
      %419 = vmatprep.subr.mxu0 0.0
      %420 = vmatpush1.msra.mxu0 0.0
      %421 = vmatprep.subr.mxu0 0.0
      %422 = vmatpush1.msra.mxu0 0.0
      %423 = vmatprep.subr.mxu0 0.0
      %424 = vmatpush1.msra.mxu0 0.0
      %425 = vmatprep.subr.mxu0 0.0
      %426 = vmatpush1.msra.mxu0 0.0
      %427 = vmatprep.subr.mxu0 0.0
      %428 = vmatpush1.msra.mxu0 0.0
      %429 = vmatprep.subr.mxu0 0.0
      %430 = vmatpush1.msra.mxu0 0.0
      %431 = vmatprep.subr.mxu0 0.0
      %432 = vmatpush1.msra.mxu0 0.0
      %433 = vmatprep.subr.mxu0 0.0
      %434 = vmatpush1.msra.mxu0 0.0
      %435 = vmatprep.subr.mxu0 0.0
      %436 = vmatpush1.msra.mxu0 0.0
      %437 = vmatprep.subr.mxu0 0.0
      %438 = vmatpush1.msra.mxu0 0.0
      %439 = vmatprep.subr.mxu0 0.0
      %440 = vmatpush1.msra.mxu0 0.0
      %441 = vmatprep.subr.mxu0 0.0
      %442 = vmatpush1.msra.mxu0 0.0
      %443 = vmatprep.subr.mxu0 0.0
      %444 = vmatpush1.msra.mxu0 0.0
      %445 = vmatprep.subr.mxu0 0.0
      %446 = vmatpush1.msra.mxu0 0.0
      %447 = vmatprep.mubr.f32.mxu0 0.0
      %448 = vmatmul.mubr.f32.gmra.mrb[0].mxu0 %v378
      %v449 = vpop.f32.mrb[0].mxu0
      %v450 = vadd.f32 %v375, %v449
      %v451 = vpop.f32.mrb[0].mxu0
      %452 = vmatprep.mubr.f32.mxu0 0.0
      %453 = vmatmul.mubr.f32.gmra.mrb[0].mxu0 %v381
      %v454 = vpop.f32.mrb[0].mxu0
      %v455 = vadd.f32 %v375, %v454
      %v456 = vpop.f32.mrb[0].mxu0
      %457 = vdwg.mxu0
      %v458 = vld [vmem:[%s1] sm:$0x1]
      %460 = vrot.lane.b32.xlu0 %v450, 96
      %v461 = vpop.permute.xlu0 %460
      %vm462 = vcmask 64512
      %v463 = vsel %vm462, %v450, 0
      %v465 = vsel %vm462, %v461, 0
      %467 = vmatprep.subr.mxu0 0.0
      %468 = vmatpush1.xpose.msra.mxu0 %v465
      %469 = vmatprep.subr.mxu0 0.0
      %470 = vmatpush1.xpose.msra.mxu0 0.0
      %471 = vmatprep.subr.mxu0 0.0
      %472 = vmatpush1.xpose.msra.mxu0 0.0
      %473 = vmatprep.subr.mxu0 0.0
      %474 = vmatpush1.xpose.msra.mxu0 0.0
      %475 = vmatprep.subr.mxu0 0.0
      %476 = vmatpush1.xpose.msra.mxu0 0.0
      %477 = vmatprep.subr.mxu0 0.0
      %478 = vmatpush1.xpose.msra.mxu0 0.0
      %479 = vmatprep.subr.mxu0 0.0
      %480 = vmatpush1.xpose.msra.mxu0 0.0
      %481 = vmatprep.subr.mxu0 0.0
      %482 = vmatpush1.xpose.msra.mxu0 0.0
      %483 = vmatprep.subr.mxu0 0.0
      %484 = vmatpush1.xpose.msra.mxu0 0.0
      %485 = vmatprep.subr.mxu0 0.0
      %486 = vmatpush1.xpose.msra.mxu0 0.0
      %487 = vmatprep.subr.mxu0 0.0
      %488 = vmatpush1.xpose.msra.mxu0 0.0
      %489 = vmatprep.subr.mxu0 0.0
      %490 = vmatpush1.xpose.msra.mxu0 0.0
      %491 = vmatprep.subr.mxu0 0.0
      %492 = vmatpush1.xpose.msra.mxu0 0.0
      %493 = vmatprep.subr.mxu0 0.0
      %494 = vmatpush1.xpose.msra.mxu0 0.0
      %495 = vmatprep.subr.mxu0 0.0
      %496 = vmatpush1.xpose.msra.mxu0 0.0
      %497 = vmatprep.subr.mxu0 0.0
      %498 = vmatpush1.xpose.msra.mxu0 0.0
      %499 = vmatprep.subr.mxu0 0.0
      %500 = vmatpush1.xpose.msra.mxu0 0.0
      %501 = vmatprep.subr.mxu0 0.0
      %502 = vmatpush1.xpose.msra.mxu0 0.0
      %503 = vmatprep.subr.mxu0 0.0
      %504 = vmatpush1.xpose.msra.mxu0 0.0
      %505 = vmatprep.subr.mxu0 0.0
      %506 = vmatpush1.xpose.msra.mxu0 0.0
      %507 = vmatprep.subr.mxu0 0.0
      %508 = vmatpush1.xpose.msra.mxu0 0.0
      %509 = vmatprep.subr.mxu0 0.0
      %510 = vmatpush1.xpose.msra.mxu0 0.0
      %511 = vmatprep.subr.mxu0 0.0
      %512 = vmatpush1.xpose.msra.mxu0 0.0
      %513 = vmatprep.subr.mxu0 0.0
      %514 = vmatpush1.xpose.msra.mxu0 0.0
      %515 = vmatprep.subr.mxu0 0.0
      %516 = vmatpush1.xpose.msra.mxu0 0.0
      %517 = vmatprep.subr.mxu0 0.0
      %518 = vmatpush1.xpose.msra.mxu0 0.0
      %519 = vmatprep.subr.mxu0 0.0
      %520 = vmatpush1.xpose.msra.mxu0 0.0
      %521 = vmatprep.subr.mxu0 0.0
      %522 = vmatpush1.xpose.msra.mxu0 0.0
      %523 = vmatprep.subr.mxu0 0.0
      %524 = vmatpush1.xpose.msra.mxu0 0.0
      %525 = vmatprep.subr.mxu0 0.0
      %526 = vmatpush1.xpose.msra.mxu0 0.0
      %527 = vmatprep.subr.mxu0 0.0
      %528 = vmatpush1.xpose.msra.mxu0 0.0
      %529 = vmatprep.subr.mxu0 0.0
      %530 = vmatpush1.xpose.msra.mxu0 0.0
      %531 = vmatprep.mubr.f32.mxu0 0.0
      %532 = vmatmul.mubr.f32.gmra.mrb[0].mxu0 %v463
      %v533 = vpop.f32.mrb[0].mxu0
      %v534 = vadd.f32 0.0, %v533
      %v535 = vpop.f32.mrb[0].mxu0
      %536 = vdwg.mxu0
      %v537 = vmul.f32 %v534, 0.35355338
      %v538 = vlaneseq
      %v539 = vshrl.u32 %v538, 7
      %v540 = vsub.s32 0, %v539
      %v541 = vrot.slane %v458, %v540
      %v542 = vadd.f32 %v537, %v541
      %v543 = vsel %vm462, %v542, -inf
      %544 = vmax.xlane.f32.xlu0 %v543
      %v545 = vpop.xlane.xlu0 %544
      %v546 = vsub.f32 %v542, %v545
      %v547 = vmul.f32 %v546, 1.442695
      %v548 = vpow.pop %v547
      %v549 = vsel %vm462, %v548, 0.0
      %550 = vadd.xlane.f32.xlu0 %v549
      %v551 = vpop.xlane.xlu0 %550
      %v552 = vrcp.pop %v551
      %v553 = vmul.f32 %v548, %v552
      %554 = vrot.lane.b32.xlu0 %v450, 64
      %v555 = vpop.permute.xlu0 %554
      %v558 = vsel %vm462, %v553, 0
      %560 = vmatprep.subr.mxu0 0.0
      %561 = vmatpush1.msra.mxu0 %v555
      %562 = vmatprep.subr.mxu0 0.0
      %563 = vmatpush1.msra.mxu0 0.0
      %564 = vmatprep.subr.mxu0 0.0
      %565 = vmatpush1.msra.mxu0 0.0
      %566 = vmatprep.subr.mxu0 0.0
      %567 = vmatpush1.msra.mxu0 0.0
      %568 = vmatprep.subr.mxu0 0.0
      %569 = vmatpush1.msra.mxu0 0.0
      %570 = vmatprep.subr.mxu0 0.0
      %571 = vmatpush1.msra.mxu0 0.0
      %572 = vmatprep.subr.mxu0 0.0
      %573 = vmatpush1.msra.mxu0 0.0
      %574 = vmatprep.subr.mxu0 0.0
      %575 = vmatpush1.msra.mxu0 0.0
      %576 = vmatprep.subr.mxu0 0.0
      %577 = vmatpush1.msra.mxu0 0.0
      %578 = vmatprep.subr.mxu0 0.0
      %579 = vmatpush1.msra.mxu0 0.0
      %580 = vmatprep.subr.mxu0 0.0
      %581 = vmatpush1.msra.mxu0 0.0
      %582 = vmatprep.subr.mxu0 0.0
      %583 = vmatpush1.msra.mxu0 0.0
      %584 = vmatprep.subr.mxu0 0.0
      %585 = vmatpush1.msra.mxu0 0.0
      %586 = vmatprep.subr.mxu0 0.0
      %587 = vmatpush1.msra.mxu0 0.0
      %588 = vmatprep.subr.mxu0 0.0
      %589 = vmatpush1.msra.mxu0 0.0
      %590 = vmatprep.subr.mxu0 0.0
      %591 = vmatpush1.msra.mxu0 0.0
      %592 = vmatprep.subr.mxu0 0.0
      %593 = vmatpush1.msra.mxu0 0.0
      %594 = vmatprep.subr.mxu0 0.0
      %595 = vmatpush1.msra.mxu0 0.0
      %596 = vmatprep.subr.mxu0 0.0
      %597 = vmatpush1.msra.mxu0 0.0
      %598 = vmatprep.subr.mxu0 0.0
      %599 = vmatpush1.msra.mxu0 0.0
      %600 = vmatprep.subr.mxu0 0.0
      %601 = vmatpush1.msra.mxu0 0.0
      %602 = vmatprep.subr.mxu0 0.0
      %603 = vmatpush1.msra.mxu0 0.0
      %604 = vmatprep.subr.mxu0 0.0
      %605 = vmatpush1.msra.mxu0 0.0
      %606 = vmatprep.subr.mxu0 0.0
      %607 = vmatpush1.msra.mxu0 0.0
      %608 = vmatprep.subr.mxu0 0.0
      %609 = vmatpush1.msra.mxu0 0.0
      %610 = vmatprep.subr.mxu0 0.0
      %611 = vmatpush1.msra.mxu0 0.0
      %612 = vmatprep.subr.mxu0 0.0
      %613 = vmatpush1.msra.mxu0 0.0
      %614 = vmatprep.subr.mxu0 0.0
      %615 = vmatpush1.msra.mxu0 0.0
      %616 = vmatprep.subr.mxu0 0.0
      %617 = vmatpush1.msra.mxu0 0.0
      %618 = vmatprep.subr.mxu0 0.0
      %619 = vmatpush1.msra.mxu0 0.0
      %620 = vmatprep.subr.mxu0 0.0
      %621 = vmatpush1.msra.mxu0 0.0
      %622 = vmatprep.subr.mxu0 0.0
      %623 = vmatpush1.msra.mxu0 0.0
      %624 = vmatprep.mubr.f32.mxu0 0.0
      %625 = vmatmul.mubr.f32.gmra.mrb[0].mxu0 %v558
      %v626 = vpop.f32.mrb[0].mxu0
      %v627 = vadd.f32 0.0, %v626
      %v628 = vpop.f32.mrb[0].mxu0
      %629 = vdwg.mxu0
      %630 = vst.msk [vmem:[#allocation3] sm:$0xff] %vm462, %v627
      %631 = vrot.lane.b32.xlu0 %v450, 120
      %v632 = vpop.permute.xlu0 %631
      %633 = vrot.lane.b32.xlu0 %v450, 88
      %v634 = vpop.permute.xlu0 %633
      %v635 = vsel %vm462, %v632, 0
      %v637 = vsel %vm462, %v634, 0
      %639 = vmatprep.subr.mxu0 0.0
      %640 = vmatpush1.xpose.msra.mxu0 %v637
      %641 = vmatprep.subr.mxu0 0.0
      %642 = vmatpush1.xpose.msra.mxu0 0.0
      %643 = vmatprep.subr.mxu0 0.0
      %644 = vmatpush1.xpose.msra.mxu0 0.0
      %645 = vmatprep.subr.mxu0 0.0
      %646 = vmatpush1.xpose.msra.mxu0 0.0
      %647 = vmatprep.subr.mxu0 0.0
      %648 = vmatpush1.xpose.msra.mxu0 0.0
      %649 = vmatprep.subr.mxu0 0.0
      %650 = vmatpush1.xpose.msra.mxu0 0.0
      %651 = vmatprep.subr.mxu0 0.0
      %652 = vmatpush1.xpose.msra.mxu0 0.0
      %653 = vmatprep.subr.mxu0 0.0
      %654 = vmatpush1.xpose.msra.mxu0 0.0
      %655 = vmatprep.subr.mxu0 0.0
      %656 = vmatpush1.xpose.msra.mxu0 0.0
      %657 = vmatprep.subr.mxu0 0.0
      %658 = vmatpush1.xpose.msra.mxu0 0.0
      %659 = vmatprep.subr.mxu0 0.0
      %660 = vmatpush1.xpose.msra.mxu0 0.0
      %661 = vmatprep.subr.mxu0 0.0
      %662 = vmatpush1.xpose.msra.mxu0 0.0
      %663 = vmatprep.subr.mxu0 0.0
      %664 = vmatpush1.xpose.msra.mxu0 0.0
      %665 = vmatprep.subr.mxu0 0.0
      %666 = vmatpush1.xpose.msra.mxu0 0.0
      %667 = vmatprep.subr.mxu0 0.0
      %668 = vmatpush1.xpose.msra.mxu0 0.0
      %669 = vmatprep.subr.mxu0 0.0
      %670 = vmatpush1.xpose.msra.mxu0 0.0
      %671 = vmatprep.subr.mxu0 0.0
      %672 = vmatpush1.xpose.msra.mxu0 0.0
      %673 = vmatprep.subr.mxu0 0.0
      %674 = vmatpush1.xpose.msra.mxu0 0.0
      %675 = vmatprep.subr.mxu0 0.0
      %676 = vmatpush1.xpose.msra.mxu0 0.0
      %677 = vmatprep.subr.mxu0 0.0
      %678 = vmatpush1.xpose.msra.mxu0 0.0
      %679 = vmatprep.subr.mxu0 0.0
      %680 = vmatpush1.xpose.msra.mxu0 0.0
      %681 = vmatprep.subr.mxu0 0.0
      %682 = vmatpush1.xpose.msra.mxu0 0.0
      %683 = vmatprep.subr.mxu0 0.0
      %684 = vmatpush1.xpose.msra.mxu0 0.0
      %685 = vmatprep.subr.mxu0 0.0
      %686 = vmatpush1.xpose.msra.mxu0 0.0
      %687 = vmatprep.subr.mxu0 0.0
      %688 = vmatpush1.xpose.msra.mxu0 0.0
      %689 = vmatprep.subr.mxu0 0.0
      %690 = vmatpush1.xpose.msra.mxu0 0.0
      %691 = vmatprep.subr.mxu0 0.0
      %692 = vmatpush1.xpose.msra.mxu0 0.0
      %693 = vmatprep.subr.mxu0 0.0
      %694 = vmatpush1.xpose.msra.mxu0 0.0
      %695 = vmatprep.subr.mxu0 0.0
      %696 = vmatpush1.xpose.msra.mxu0 0.0
      %697 = vmatprep.subr.mxu0 0.0
      %698 = vmatpush1.xpose.msra.mxu0 0.0
      %699 = vmatprep.subr.mxu0 0.0
      %700 = vmatpush1.xpose.msra.mxu0 0.0
      %701 = vmatprep.subr.mxu0 0.0
      %702 = vmatpush1.xpose.msra.mxu0 0.0
      %703 = vmatprep.mubr.f32.mxu0 0.0
      %704 = vmatmul.mubr.f32.gmra.mrb[0].mxu0 %v635
      %v705 = vpop.f32.mrb[0].mxu0
      %v706 = vadd.f32 0.0, %v705
      %v707 = vpop.f32.mrb[0].mxu0
      %708 = vdwg.mxu0
      %v709 = vmul.f32 %v706, 0.35355338
      %v710 = vadd.f32 %v709, %v541
      %v711 = vsel %vm462, %v710, -inf
      %712 = vmax.xlane.f32.xlu0 %v711
      %v713 = vpop.xlane.xlu0 %712
      %v714 = vsub.f32 %v710, %v713
      %v715 = vmul.f32 %v714, 1.442695
      %v716 = vpow.pop %v715
      %v717 = vsel %vm462, %v716, 0.0
      %718 = vadd.xlane.f32.xlu0 %v717
      %v719 = vpop.xlane.xlu0 %718
      %v720 = vrcp.pop %v719
      %v721 = vmul.f32 %v716, %v720
      %722 = vrot.lane.b32.xlu0 %v450, 56
      %v723 = vpop.permute.xlu0 %722
      %v726 = vsel %vm462, %v721, 0
      %728 = vmatprep.subr.mxu0 0.0
      %729 = vmatpush1.msra.mxu0 %v723
      %730 = vmatprep.subr.mxu0 0.0
      %731 = vmatpush1.msra.mxu0 0.0
      %732 = vmatprep.subr.mxu0 0.0
      %733 = vmatpush1.msra.mxu0 0.0
      %734 = vmatprep.subr.mxu0 0.0
      %735 = vmatpush1.msra.mxu0 0.0
      %736 = vmatprep.subr.mxu0 0.0
      %737 = vmatpush1.msra.mxu0 0.0
      %738 = vmatprep.subr.mxu0 0.0
      %739 = vmatpush1.msra.mxu0 0.0
      %740 = vmatprep.subr.mxu0 0.0
      %741 = vmatpush1.msra.mxu0 0.0
      %742 = vmatprep.subr.mxu0 0.0
      %743 = vmatpush1.msra.mxu0 0.0
      %744 = vmatprep.subr.mxu0 0.0
      %745 = vmatpush1.msra.mxu0 0.0
      %746 = vmatprep.subr.mxu0 0.0
      %747 = vmatpush1.msra.mxu0 0.0
      %748 = vmatprep.subr.mxu0 0.0
      %749 = vmatpush1.msra.mxu0 0.0
      %750 = vmatprep.subr.mxu0 0.0
      %751 = vmatpush1.msra.mxu0 0.0
      %752 = vmatprep.subr.mxu0 0.0
      %753 = vmatpush1.msra.mxu0 0.0
      %754 = vmatprep.subr.mxu0 0.0
      %755 = vmatpush1.msra.mxu0 0.0
      %756 = vmatprep.subr.mxu0 0.0
      %757 = vmatpush1.msra.mxu0 0.0
      %758 = vmatprep.subr.mxu0 0.0
      %759 = vmatpush1.msra.mxu0 0.0
      %760 = vmatprep.subr.mxu0 0.0
      %761 = vmatpush1.msra.mxu0 0.0
      %762 = vmatprep.subr.mxu0 0.0
      %763 = vmatpush1.msra.mxu0 0.0
      %764 = vmatprep.subr.mxu0 0.0
      %765 = vmatpush1.msra.mxu0 0.0
      %766 = vmatprep.subr.mxu0 0.0
      %767 = vmatpush1.msra.mxu0 0.0
      %768 = vmatprep.subr.mxu0 0.0
      %769 = vmatpush1.msra.mxu0 0.0
      %770 = vmatprep.subr.mxu0 0.0
      %771 = vmatpush1.msra.mxu0 0.0
      %772 = vmatprep.subr.mxu0 0.0
      %773 = vmatpush1.msra.mxu0 0.0
      %774 = vmatprep.subr.mxu0 0.0
      %775 = vmatpush1.msra.mxu0 0.0
      %776 = vmatprep.subr.mxu0 0.0
      %777 = vmatpush1.msra.mxu0 0.0
      %778 = vmatprep.subr.mxu0 0.0
      %779 = vmatpush1.msra.mxu0 0.0
      %780 = vmatprep.subr.mxu0 0.0
      %781 = vmatpush1.msra.mxu0 0.0
      %782 = vmatprep.subr.mxu0 0.0
      %783 = vmatpush1.msra.mxu0 0.0
      %784 = vmatprep.subr.mxu0 0.0
      %785 = vmatpush1.msra.mxu0 0.0
      %786 = vmatprep.subr.mxu0 0.0
      %787 = vmatpush1.msra.mxu0 0.0
      %788 = vmatprep.subr.mxu0 0.0
      %789 = vmatpush1.msra.mxu0 0.0
      %790 = vmatprep.subr.mxu0 0.0
      %791 = vmatpush1.msra.mxu0 0.0
      %792 = vmatprep.mubr.f32.mxu0 0.0
      %793 = vmatmul.mubr.f32.gmra.mrb[0].mxu0 %v726
      %v794 = vpop.f32.mrb[0].mxu0
      %v795 = vadd.f32 0.0, %v794
      %v796 = vpop.f32.mrb[0].mxu0
      %797 = vdwg.mxu0
      %799 = vrot.lane.b32.xlu0 %v795, 8
      %v800 = vpop.permute.xlu0 %799
      %vm802 = vcmask 130112
      %803 = vst.msk [vmem:[#allocation3] sm:$0xff] %vm802, %v800
      %804 = vrot.lane.b32.xlu0 %v450, 112
      %v805 = vpop.permute.xlu0 %804
      %806 = vrot.lane.b32.xlu0 %v450, 80
      %v807 = vpop.permute.xlu0 %806
      %v808 = vsel %vm462, %v805, 0
      %v810 = vsel %vm462, %v807, 0
      %812 = vmatprep.subr.mxu0 0.0
      %813 = vmatpush1.xpose.msra.mxu0 %v810
      %814 = vmatprep.subr.mxu0 0.0
      %815 = vmatpush1.xpose.msra.mxu0 0.0
      %816 = vmatprep.subr.mxu0 0.0
      %817 = vmatpush1.xpose.msra.mxu0 0.0
      %818 = vmatprep.subr.mxu0 0.0
      %819 = vmatpush1.xpose.msra.mxu0 0.0
      %820 = vmatprep.subr.mxu0 0.0
      %821 = vmatpush1.xpose.msra.mxu0 0.0
      %822 = vmatprep.subr.mxu0 0.0
      %823 = vmatpush1.xpose.msra.mxu0 0.0
      %824 = vmatprep.subr.mxu0 0.0
      %825 = vmatpush1.xpose.msra.mxu0 0.0
      %826 = vmatprep.subr.mxu0 0.0
      %827 = vmatpush1.xpose.msra.mxu0 0.0
      %828 = vmatprep.subr.mxu0 0.0
      %829 = vmatpush1.xpose.msra.mxu0 0.0
      %830 = vmatprep.subr.mxu0 0.0
      %831 = vmatpush1.xpose.msra.mxu0 0.0
      %832 = vmatprep.subr.mxu0 0.0
      %833 = vmatpush1.xpose.msra.mxu0 0.0
      %834 = vmatprep.subr.mxu0 0.0
      %835 = vmatpush1.xpose.msra.mxu0 0.0
      %836 = vmatprep.subr.mxu0 0.0
      %837 = vmatpush1.xpose.msra.mxu0 0.0
      %838 = vmatprep.subr.mxu0 0.0
      %839 = vmatpush1.xpose.msra.mxu0 0.0
      %840 = vmatprep.subr.mxu0 0.0
      %841 = vmatpush1.xpose.msra.mxu0 0.0
      %842 = vmatprep.subr.mxu0 0.0
      %843 = vmatpush1.xpose.msra.mxu0 0.0
      %844 = vmatprep.subr.mxu0 0.0
      %845 = vmatpush1.xpose.msra.mxu0 0.0
      %846 = vmatprep.subr.mxu0 0.0
      %847 = vmatpush1.xpose.msra.mxu0 0.0
      %848 = vmatprep.subr.mxu0 0.0
      %849 = vmatpush1.xpose.msra.mxu0 0.0
      %850 = vmatprep.subr.mxu0 0.0
      %851 = vmatpush1.xpose.msra.mxu0 0.0
      %852 = vmatprep.subr.mxu0 0.0
      %853 = vmatpush1.xpose.msra.mxu0 0.0
      %854 = vmatprep.subr.mxu0 0.0
      %855 = vmatpush1.xpose.msra.mxu0 0.0
      %856 = vmatprep.subr.mxu0 0.0
      %857 = vmatpush1.xpose.msra.mxu0 0.0
      %858 = vmatprep.subr.mxu0 0.0
      %859 = vmatpush1.xpose.msra.mxu0 0.0
      %860 = vmatprep.subr.mxu0 0.0
      %861 = vmatpush1.xpose.msra.mxu0 0.0
      %862 = vmatprep.subr.mxu0 0.0
      %863 = vmatpush1.xpose.msra.mxu0 0.0
      %864 = vmatprep.subr.mxu0 0.0
      %865 = vmatpush1.xpose.msra.mxu0 0.0
      %866 = vmatprep.subr.mxu0 0.0
      %867 = vmatpush1.xpose.msra.mxu0 0.0
      %868 = vmatprep.subr.mxu0 0.0
      %869 = vmatpush1.xpose.msra.mxu0 0.0
      %870 = vmatprep.subr.mxu0 0.0
      %871 = vmatpush1.xpose.msra.mxu0 0.0
      %872 = vmatprep.subr.mxu0 0.0
      %873 = vmatpush1.xpose.msra.mxu0 0.0
      %874 = vmatprep.subr.mxu0 0.0
      %875 = vmatpush1.xpose.msra.mxu0 0.0
      %876 = vmatprep.mubr.f32.mxu0 0.0
      %877 = vmatmul.mubr.f32.gmra.mrb[0].mxu0 %v808
      %v878 = vpop.f32.mrb[0].mxu0
      %v879 = vadd.f32 0.0, %v878
      %v880 = vpop.f32.mrb[0].mxu0
      %881 = vdwg.mxu0
      %v882 = vmul.f32 %v879, 0.35355338
      %v883 = vadd.f32 %v882, %v541
      %v884 = vsel %vm462, %v883, -inf
      %885 = vmax.xlane.f32.xlu0 %v884
      %v886 = vpop.xlane.xlu0 %885
      %v887 = vsub.f32 %v883, %v886
      %v888 = vmul.f32 %v887, 1.442695
      %v889 = vpow.pop %v888
      %v890 = vsel %vm462, %v889, 0.0
      %891 = vadd.xlane.f32.xlu0 %v890
      %v892 = vpop.xlane.xlu0 %891
      %v893 = vrcp.pop %v892
      %v894 = vmul.f32 %v889, %v893
      %895 = vrot.lane.b32.xlu0 %v450, 48
      %v896 = vpop.permute.xlu0 %895
      %v899 = vsel %vm462, %v894, 0
      %901 = vmatprep.subr.mxu0 0.0
      %902 = vmatpush1.msra.mxu0 %v896
      %903 = vmatprep.subr.mxu0 0.0
      %904 = vmatpush1.msra.mxu0 0.0
      %905 = vmatprep.subr.mxu0 0.0
      %906 = vmatpush1.msra.mxu0 0.0
      %907 = vmatprep.subr.mxu0 0.0
      %908 = vmatpush1.msra.mxu0 0.0
      %909 = vmatprep.subr.mxu0 0.0
      %910 = vmatpush1.msra.mxu0 0.0
      %911 = vmatprep.subr.mxu0 0.0
      %912 = vmatpush1.msra.mxu0 0.0
      %913 = vmatprep.subr.mxu0 0.0
      %914 = vmatpush1.msra.mxu0 0.0
      %915 = vmatprep.subr.mxu0 0.0
      %916 = vmatpush1.msra.mxu0 0.0
      %917 = vmatprep.subr.mxu0 0.0
      %918 = vmatpush1.msra.mxu0 0.0
      %919 = vmatprep.subr.mxu0 0.0
      %920 = vmatpush1.msra.mxu0 0.0
      %921 = vmatprep.subr.mxu0 0.0
      %922 = vmatpush1.msra.mxu0 0.0
      %923 = vmatprep.subr.mxu0 0.0
      %924 = vmatpush1.msra.mxu0 0.0
      %925 = vmatprep.subr.mxu0 0.0
      %926 = vmatpush1.msra.mxu0 0.0
      %927 = vmatprep.subr.mxu0 0.0
      %928 = vmatpush1.msra.mxu0 0.0
      %929 = vmatprep.subr.mxu0 0.0
      %930 = vmatpush1.msra.mxu0 0.0
      %931 = vmatprep.subr.mxu0 0.0
      %932 = vmatpush1.msra.mxu0 0.0
      %933 = vmatprep.subr.mxu0 0.0
      %934 = vmatpush1.msra.mxu0 0.0
      %935 = vmatprep.subr.mxu0 0.0
      %936 = vmatpush1.msra.mxu0 0.0
      %937 = vmatprep.subr.mxu0 0.0
      %938 = vmatpush1.msra.mxu0 0.0
      %939 = vmatprep.subr.mxu0 0.0
      %940 = vmatpush1.msra.mxu0 0.0
      %941 = vmatprep.subr.mxu0 0.0
      %942 = vmatpush1.msra.mxu0 0.0
      %943 = vmatprep.subr.mxu0 0.0
      %944 = vmatpush1.msra.mxu0 0.0
      %945 = vmatprep.subr.mxu0 0.0
      %946 = vmatpush1.msra.mxu0 0.0
      %947 = vmatprep.subr.mxu0 0.0
      %948 = vmatpush1.msra.mxu0 0.0
      %949 = vmatprep.subr.mxu0 0.0
      %950 = vmatpush1.msra.mxu0 0.0
      %951 = vmatprep.subr.mxu0 0.0
      %952 = vmatpush1.msra.mxu0 0.0
      %953 = vmatprep.subr.mxu0 0.0
      %954 = vmatpush1.msra.mxu0 0.0
      %955 = vmatprep.subr.mxu0 0.0
      %956 = vmatpush1.msra.mxu0 0.0
      %957 = vmatprep.subr.mxu0 0.0
      %958 = vmatpush1.msra.mxu0 0.0
      %959 = vmatprep.subr.mxu0 0.0
      %960 = vmatpush1.msra.mxu0 0.0
      %961 = vmatprep.subr.mxu0 0.0
      %962 = vmatpush1.msra.mxu0 0.0
      %963 = vmatprep.subr.mxu0 0.0
      %964 = vmatpush1.msra.mxu0 0.0
      %965 = vmatprep.mubr.f32.mxu0 0.0
      %966 = vmatmul.mubr.f32.gmra.mrb[0].mxu0 %v899
      %v967 = vpop.f32.mrb[0].mxu0
      %v968 = vadd.f32 0.0, %v967
      %v969 = vpop.f32.mrb[0].mxu0
      %970 = vdwg.mxu0
      %972 = vrot.lane.b32.xlu0 %v968, 16
      %v973 = vpop.permute.xlu0 %972
      %vm975 = vcmask 195712
      %976 = vst.msk [vmem:[#allocation3] sm:$0xff] %vm975, %v973
      %977 = vrot.lane.b32.xlu0 %v450, 104
      %v978 = vpop.permute.xlu0 %977
      %979 = vrot.lane.b32.xlu0 %v450, 72
      %v980 = vpop.permute.xlu0 %979
      %v981 = vsel %vm462, %v978, 0
      %v983 = vsel %vm462, %v980, 0
      %985 = vmatprep.subr.mxu0 0.0
      %986 = vmatpush1.xpose.msra.mxu0 %v983
      %987 = vmatprep.subr.mxu0 0.0
      %988 = vmatpush1.xpose.msra.mxu0 0.0
      %989 = vmatprep.subr.mxu0 0.0
      %990 = vmatpush1.xpose.msra.mxu0 0.0
      %991 = vmatprep.subr.mxu0 0.0
      %992 = vmatpush1.xpose.msra.mxu0 0.0
      %993 = vmatprep.subr.mxu0 0.0
      %994 = vmatpush1.xpose.msra.mxu0 0.0
      %995 = vmatprep.subr.mxu0 0.0
      %996 = vmatpush1.xpose.msra.mxu0 0.0
      %997 = vmatprep.subr.mxu0 0.0
      %998 = vmatpush1.xpose.msra.mxu0 0.0
      %999 = vmatprep.subr.mxu0 0.0
      %1000 = vmatpush1.xpose.msra.mxu0 0.0
      %1001 = vmatprep.subr.mxu0 0.0
      %1002 = vmatpush1.xpose.msra.mxu0 0.0
      %1003 = vmatprep.subr.mxu0 0.0
      %1004 = vmatpush1.xpose.msra.mxu0 0.0
      %1005 = vmatprep.subr.mxu0 0.0
      %1006 = vmatpush1.xpose.msra.mxu0 0.0
      %1007 = vmatprep.subr.mxu0 0.0
      %1008 = vmatpush1.xpose.msra.mxu0 0.0
      %1009 = vmatprep.subr.mxu0 0.0
      %1010 = vmatpush1.xpose.msra.mxu0 0.0
      %1011 = vmatprep.subr.mxu0 0.0
      %1012 = vmatpush1.xpose.msra.mxu0 0.0
      %1013 = vmatprep.subr.mxu0 0.0
      %1014 = vmatpush1.xpose.msra.mxu0 0.0
      %1015 = vmatprep.subr.mxu0 0.0
      %1016 = vmatpush1.xpose.msra.mxu0 0.0
      %1017 = vmatprep.subr.mxu0 0.0
      %1018 = vmatpush1.xpose.msra.mxu0 0.0
      %1019 = vmatprep.subr.mxu0 0.0
      %1020 = vmatpush1.xpose.msra.mxu0 0.0
      %1021 = vmatprep.subr.mxu0 0.0
      %1022 = vmatpush1.xpose.msra.mxu0 0.0
      %1023 = vmatprep.subr.mxu0 0.0
      %1024 = vmatpush1.xpose.msra.mxu0 0.0
      %1025 = vmatprep.subr.mxu0 0.0
      %1026 = vmatpush1.xpose.msra.mxu0 0.0
      %1027 = vmatprep.subr.mxu0 0.0
      %1028 = vmatpush1.xpose.msra.mxu0 0.0
      %1029 = vmatprep.subr.mxu0 0.0
      %1030 = vmatpush1.xpose.msra.mxu0 0.0
      %1031 = vmatprep.subr.mxu0 0.0
      %1032 = vmatpush1.xpose.msra.mxu0 0.0
      %1033 = vmatprep.subr.mxu0 0.0
      %1034 = vmatpush1.xpose.msra.mxu0 0.0
      %1035 = vmatprep.subr.mxu0 0.0
      %1036 = vmatpush1.xpose.msra.mxu0 0.0
      %1037 = vmatprep.subr.mxu0 0.0
      %1038 = vmatpush1.xpose.msra.mxu0 0.0
      %1039 = vmatprep.subr.mxu0 0.0
      %1040 = vmatpush1.xpose.msra.mxu0 0.0
      %1041 = vmatprep.subr.mxu0 0.0
      %1042 = vmatpush1.xpose.msra.mxu0 0.0
      %1043 = vmatprep.subr.mxu0 0.0
      %1044 = vmatpush1.xpose.msra.mxu0 0.0
      %1045 = vmatprep.subr.mxu0 0.0
      %1046 = vmatpush1.xpose.msra.mxu0 0.0
      %1047 = vmatprep.subr.mxu0 0.0
      %1048 = vmatpush1.xpose.msra.mxu0 0.0
      %1049 = vmatprep.mubr.f32.mxu0 0.0
      %1050 = vmatmul.mubr.f32.gmra.mrb[0].mxu0 %v981
      %v1051 = vpop.f32.mrb[0].mxu0
      %v1052 = vadd.f32 0.0, %v1051
      %v1053 = vpop.f32.mrb[0].mxu0
      %1054 = vdwg.mxu0
      %v1055 = vmul.f32 %v1052, 0.35355338
      %v1056 = vadd.f32 %v1055, %v541
      %v1057 = vsel %vm462, %v1056, -inf
      %1058 = vmax.xlane.f32.xlu0 %v1057
      %v1059 = vpop.xlane.xlu0 %1058
      %v1060 = vsub.f32 %v1056, %v1059
      %v1061 = vmul.f32 %v1060, 1.442695
      %v1062 = vpow.pop %v1061
      %v1063 = vsel %vm462, %v1062, 0.0
      %1064 = vadd.xlane.f32.xlu0 %v1063
      %v1065 = vpop.xlane.xlu0 %1064
      %v1066 = vrcp.pop %v1065
      %v1067 = vmul.f32 %v1062, %v1066
      %1068 = vrot.lane.b32.xlu0 %v450, 40
      %v1069 = vpop.permute.xlu0 %1068
      %v1072 = vsel %vm462, %v1067, 0
      %1074 = vmatprep.subr.mxu0 0.0
      %1075 = vmatpush1.msra.mxu0 %v1069
      %1076 = vmatprep.subr.mxu0 0.0
      %1077 = vmatpush1.msra.mxu0 0.0
      %1078 = vmatprep.subr.mxu0 0.0
      %1079 = vmatpush1.msra.mxu0 0.0
      %1080 = vmatprep.subr.mxu0 0.0
      %1081 = vmatpush1.msra.mxu0 0.0
      %1082 = vmatprep.subr.mxu0 0.0
      %1083 = vmatpush1.msra.mxu0 0.0
      %1084 = vmatprep.subr.mxu0 0.0
      %1085 = vmatpush1.msra.mxu0 0.0
      %1086 = vmatprep.subr.mxu0 0.0
      %1087 = vmatpush1.msra.mxu0 0.0
      %1088 = vmatprep.subr.mxu0 0.0
      %1089 = vmatpush1.msra.mxu0 0.0
      %1090 = vmatprep.subr.mxu0 0.0
      %1091 = vmatpush1.msra.mxu0 0.0
      %1092 = vmatprep.subr.mxu0 0.0
      %1093 = vmatpush1.msra.mxu0 0.0
      %1094 = vmatprep.subr.mxu0 0.0
      %1095 = vmatpush1.msra.mxu0 0.0
      %1096 = vmatprep.subr.mxu0 0.0
      %1097 = vmatpush1.msra.mxu0 0.0
      %1098 = vmatprep.subr.mxu0 0.0
      %1099 = vmatpush1.msra.mxu0 0.0
      %1100 = vmatprep.subr.mxu0 0.0
      %1101 = vmatpush1.msra.mxu0 0.0
      %1102 = vmatprep.subr.mxu0 0.0
      %1103 = vmatpush1.msra.mxu0 0.0
      %1104 = vmatprep.subr.mxu0 0.0
      %1105 = vmatpush1.msra.mxu0 0.0
      %1106 = vmatprep.subr.mxu0 0.0
      %1107 = vmatpush1.msra.mxu0 0.0
      %1108 = vmatprep.subr.mxu0 0.0
      %1109 = vmatpush1.msra.mxu0 0.0
      %1110 = vmatprep.subr.mxu0 0.0
      %1111 = vmatpush1.msra.mxu0 0.0
      %1112 = vmatprep.subr.mxu0 0.0
      %1113 = vmatpush1.msra.mxu0 0.0
      %1114 = vmatprep.subr.mxu0 0.0
      %1115 = vmatpush1.msra.mxu0 0.0
      %1116 = vmatprep.subr.mxu0 0.0
      %1117 = vmatpush1.msra.mxu0 0.0
      %1118 = vmatprep.subr.mxu0 0.0
      %1119 = vmatpush1.msra.mxu0 0.0
      %1120 = vmatprep.subr.mxu0 0.0
      %1121 = vmatpush1.msra.mxu0 0.0
      %1122 = vmatprep.subr.mxu0 0.0
      %1123 = vmatpush1.msra.mxu0 0.0
      %1124 = vmatprep.subr.mxu0 0.0
      %1125 = vmatpush1.msra.mxu0 0.0
      %1126 = vmatprep.subr.mxu0 0.0
      %1127 = vmatpush1.msra.mxu0 0.0
      %1128 = vmatprep.subr.mxu0 0.0
      %1129 = vmatpush1.msra.mxu0 0.0
      %1130 = vmatprep.subr.mxu0 0.0
      %1131 = vmatpush1.msra.mxu0 0.0
      %1132 = vmatprep.subr.mxu0 0.0
      %1133 = vmatpush1.msra.mxu0 0.0
      %1134 = vmatprep.subr.mxu0 0.0
      %1135 = vmatpush1.msra.mxu0 0.0
      %1136 = vmatprep.subr.mxu0 0.0
      %1137 = vmatpush1.msra.mxu0 0.0
      %1138 = vmatprep.mubr.f32.mxu0 0.0
      %1139 = vmatmul.mubr.f32.gmra.mrb[0].mxu0 %v1072
      %v1140 = vpop.f32.mrb[0].mxu0
      %v1141 = vadd.f32 0.0, %v1140
      %v1142 = vpop.f32.mrb[0].mxu0
      %1143 = vdwg.mxu0
      %1145 = vrot.lane.b32.xlu0 %v1141, 24
      %v1146 = vpop.permute.xlu0 %1145
      %vm1148 = vcmask 261312
      %1149 = vst.msk [vmem:[#allocation3] sm:$0xff] %vm1148, %v1146
      %v1150 = vld [vmem:[%s1 + $0x1] sm:$0x1]
      %1152 = vrot.lane.b32.xlu0 %v455, 96
      %v1153 = vpop.permute.xlu0 %1152
      %v1154 = vsel %vm462, %v455, 0
      %v1156 = vsel %vm462, %v1153, 0
      %1158 = vmatprep.subr.mxu0 0.0
      %1159 = vmatpush1.xpose.msra.mxu0 %v1156
      %1160 = vmatprep.subr.mxu0 0.0
      %1161 = vmatpush1.xpose.msra.mxu0 0.0
      %1162 = vmatprep.subr.mxu0 0.0
      %1163 = vmatpush1.xpose.msra.mxu0 0.0
      %1164 = vmatprep.subr.mxu0 0.0
      %1165 = vmatpush1.xpose.msra.mxu0 0.0
      %1166 = vmatprep.subr.mxu0 0.0
      %1167 = vmatpush1.xpose.msra.mxu0 0.0
      %1168 = vmatprep.subr.mxu0 0.0
      %1169 = vmatpush1.xpose.msra.mxu0 0.0
      %1170 = vmatprep.subr.mxu0 0.0
      %1171 = vmatpush1.xpose.msra.mxu0 0.0
      %1172 = vmatprep.subr.mxu0 0.0
      %1173 = vmatpush1.xpose.msra.mxu0 0.0
      %1174 = vmatprep.subr.mxu0 0.0
      %1175 = vmatpush1.xpose.msra.mxu0 0.0
      %1176 = vmatprep.subr.mxu0 0.0
      %1177 = vmatpush1.xpose.msra.mxu0 0.0
      %1178 = vmatprep.subr.mxu0 0.0
      %1179 = vmatpush1.xpose.msra.mxu0 0.0
      %1180 = vmatprep.subr.mxu0 0.0
      %1181 = vmatpush1.xpose.msra.mxu0 0.0
      %1182 = vmatprep.subr.mxu0 0.0
      %1183 = vmatpush1.xpose.msra.mxu0 0.0
      %1184 = vmatprep.subr.mxu0 0.0
      %1185 = vmatpush1.xpose.msra.mxu0 0.0
      %1186 = vmatprep.subr.mxu0 0.0
      %1187 = vmatpush1.xpose.msra.mxu0 0.0
      %1188 = vmatprep.subr.mxu0 0.0
      %1189 = vmatpush1.xpose.msra.mxu0 0.0
      %1190 = vmatprep.subr.mxu0 0.0
      %1191 = vmatpush1.xpose.msra.mxu0 0.0
      %1192 = vmatprep.subr.mxu0 0.0
      %1193 = vmatpush1.xpose.msra.mxu0 0.0
      %1194 = vmatprep.subr.mxu0 0.0
      %1195 = vmatpush1.xpose.msra.mxu0 0.0
      %1196 = vmatprep.subr.mxu0 0.0
      %1197 = vmatpush1.xpose.msra.mxu0 0.0
      %1198 = vmatprep.subr.mxu0 0.0
      %1199 = vmatpush1.xpose.msra.mxu0 0.0
      %1200 = vmatprep.subr.mxu0 0.0
      %1201 = vmatpush1.xpose.msra.mxu0 0.0
      %1202 = vmatprep.subr.mxu0 0.0
      %1203 = vmatpush1.xpose.msra.mxu0 0.0
      %1204 = vmatprep.subr.mxu0 0.0
      %1205 = vmatpush1.xpose.msra.mxu0 0.0
      %1206 = vmatprep.subr.mxu0 0.0
      %1207 = vmatpush1.xpose.msra.mxu0 0.0
      %1208 = vmatprep.subr.mxu0 0.0
      %1209 = vmatpush1.xpose.msra.mxu0 0.0
      %1210 = vmatprep.subr.mxu0 0.0
      %1211 = vmatpush1.xpose.msra.mxu0 0.0
      %1212 = vmatprep.subr.mxu0 0.0
      %1213 = vmatpush1.xpose.msra.mxu0 0.0
      %1214 = vmatprep.subr.mxu0 0.0
      %1215 = vmatpush1.xpose.msra.mxu0 0.0
      %1216 = vmatprep.subr.mxu0 0.0
      %1217 = vmatpush1.xpose.msra.mxu0 0.0
      %1218 = vmatprep.subr.mxu0 0.0
      %1219 = vmatpush1.xpose.msra.mxu0 0.0
      %1220 = vmatprep.subr.mxu0 0.0
      %1221 = vmatpush1.xpose.msra.mxu0 0.0
      %1222 = vmatprep.mubr.f32.mxu0 0.0
      %1223 = vmatmul.mubr.f32.gmra.mrb[0].mxu0 %v1154
      %v1224 = vpop.f32.mrb[0].mxu0
      %v1225 = vadd.f32 0.0, %v1224
      %v1226 = vpop.f32.mrb[0].mxu0
      %1227 = vdwg.mxu0
      %v1228 = vmul.f32 %v1225, 0.35355338
      %v1229 = vlaneseq
      %v1230 = vshrl.u32 %v1229, 7
      %v1231 = vsub.s32 0, %v1230
      %v1232 = vrot.slane %v1150, %v1231
      %v1233 = vadd.f32 %v1228, %v1232
      %v1234 = vsel %vm462, %v1233, -inf
      %1235 = vmax.xlane.f32.xlu0 %v1234
      %v1236 = vpop.xlane.xlu0 %1235
      %v1237 = vsub.f32 %v1233, %v1236
      %v1238 = vmul.f32 %v1237, 1.442695
      %v1239 = vpow.pop %v1238
      %v1240 = vsel %vm462, %v1239, 0.0
      %1241 = vadd.xlane.f32.xlu0 %v1240
      %v1242 = vpop.xlane.xlu0 %1241
      %v1243 = vrcp.pop %v1242
      %v1244 = vmul.f32 %v1239, %v1243
      %1245 = vrot.lane.b32.xlu0 %v455, 64
      %v1246 = vpop.permute.xlu0 %1245
      %v1249 = vsel %vm462, %v1244, 0
      %1251 = vmatprep.subr.mxu0 0.0
      %1252 = vmatpush1.msra.mxu0 %v1246
      %1253 = vmatprep.subr.mxu0 0.0
      %1254 = vmatpush1.msra.mxu0 0.0
      %1255 = vmatprep.subr.mxu0 0.0
      %1256 = vmatpush1.msra.mxu0 0.0
      %1257 = vmatprep.subr.mxu0 0.0
      %1258 = vmatpush1.msra.mxu0 0.0
      %1259 = vmatprep.subr.mxu0 0.0
      %1260 = vmatpush1.msra.mxu0 0.0
      %1261 = vmatprep.subr.mxu0 0.0
      %1262 = vmatpush1.msra.mxu0 0.0
      %1263 = vmatprep.subr.mxu0 0.0
      %1264 = vmatpush1.msra.mxu0 0.0
      %1265 = vmatprep.subr.mxu0 0.0
      %1266 = vmatpush1.msra.mxu0 0.0
      %1267 = vmatprep.subr.mxu0 0.0
      %1268 = vmatpush1.msra.mxu0 0.0
      %1269 = vmatprep.subr.mxu0 0.0
      %1270 = vmatpush1.msra.mxu0 0.0
      %1271 = vmatprep.subr.mxu0 0.0
      %1272 = vmatpush1.msra.mxu0 0.0
      %1273 = vmatprep.subr.mxu0 0.0
      %1274 = vmatpush1.msra.mxu0 0.0
      %1275 = vmatprep.subr.mxu0 0.0
      %1276 = vmatpush1.msra.mxu0 0.0
      %1277 = vmatprep.subr.mxu0 0.0
      %1278 = vmatpush1.msra.mxu0 0.0
      %1279 = vmatprep.subr.mxu0 0.0
      %1280 = vmatpush1.msra.mxu0 0.0
      %1281 = vmatprep.subr.mxu0 0.0
      %1282 = vmatpush1.msra.mxu0 0.0
      %1283 = vmatprep.subr.mxu0 0.0
      %1284 = vmatpush1.msra.mxu0 0.0
      %1285 = vmatprep.subr.mxu0 0.0
      %1286 = vmatpush1.msra.mxu0 0.0
      %1287 = vmatprep.subr.mxu0 0.0
      %1288 = vmatpush1.msra.mxu0 0.0
      %1289 = vmatprep.subr.mxu0 0.0
      %1290 = vmatpush1.msra.mxu0 0.0
      %1291 = vmatprep.subr.mxu0 0.0
      %1292 = vmatpush1.msra.mxu0 0.0
      %1293 = vmatprep.subr.mxu0 0.0
      %1294 = vmatpush1.msra.mxu0 0.0
      %1295 = vmatprep.subr.mxu0 0.0
      %1296 = vmatpush1.msra.mxu0 0.0
      %1297 = vmatprep.subr.mxu0 0.0
      %1298 = vmatpush1.msra.mxu0 0.0
      %1299 = vmatprep.subr.mxu0 0.0
      %1300 = vmatpush1.msra.mxu0 0.0
      %1301 = vmatprep.subr.mxu0 0.0
      %1302 = vmatpush1.msra.mxu0 0.0
      %1303 = vmatprep.subr.mxu0 0.0
      %1304 = vmatpush1.msra.mxu0 0.0
      %1305 = vmatprep.subr.mxu0 0.0
      %1306 = vmatpush1.msra.mxu0 0.0
      %1307 = vmatprep.subr.mxu0 0.0
      %1308 = vmatpush1.msra.mxu0 0.0
      %1309 = vmatprep.subr.mxu0 0.0
      %1310 = vmatpush1.msra.mxu0 0.0
      %1311 = vmatprep.subr.mxu0 0.0
      %1312 = vmatpush1.msra.mxu0 0.0
      %1313 = vmatprep.subr.mxu0 0.0
      %1314 = vmatpush1.msra.mxu0 0.0
      %1315 = vmatprep.mubr.f32.mxu0 0.0
      %1316 = vmatmul.mubr.f32.gmra.mrb[0].mxu0 %v1249
      %v1317 = vpop.f32.mrb[0].mxu0
      %v1318 = vadd.f32 0.0, %v1317
      %v1319 = vpop.f32.mrb[0].mxu0
      %1320 = vdwg.mxu0
      %1321 = vst.msk [vmem:[#allocation3 + $0x8] sm:$0xff] %vm462, %v1318
      %1322 = vrot.lane.b32.xlu0 %v455, 120
      %v1323 = vpop.permute.xlu0 %1322
      %1324 = vrot.lane.b32.xlu0 %v455, 88
      %v1325 = vpop.permute.xlu0 %1324
      %v1326 = vsel %vm462, %v1323, 0
      %v1328 = vsel %vm462, %v1325, 0
      %1330 = vmatprep.subr.mxu0 0.0
      %1331 = vmatpush1.xpose.msra.mxu0 %v1328
      %1332 = vmatprep.subr.mxu0 0.0
      %1333 = vmatpush1.xpose.msra.mxu0 0.0
      %1334 = vmatprep.subr.mxu0 0.0
      %1335 = vmatpush1.xpose.msra.mxu0 0.0
      %1336 = vmatprep.subr.mxu0 0.0
      %1337 = vmatpush1.xpose.msra.mxu0 0.0
      %1338 = vmatprep.subr.mxu0 0.0
      %1339 = vmatpush1.xpose.msra.mxu0 0.0
      %1340 = vmatprep.subr.mxu0 0.0
      %1341 = vmatpush1.xpose.msra.mxu0 0.0
      %1342 = vmatprep.subr.mxu0 0.0
      %1343 = vmatpush1.xpose.msra.mxu0 0.0
      %1344 = vmatprep.subr.mxu0 0.0
      %1345 = vmatpush1.xpose.msra.mxu0 0.0
      %1346 = vmatprep.subr.mxu0 0.0
      %1347 = vmatpush1.xpose.msra.mxu0 0.0
      %1348 = vmatprep.subr.mxu0 0.0
      %1349 = vmatpush1.xpose.msra.mxu0 0.0
      %1350 = vmatprep.subr.mxu0 0.0
      %1351 = vmatpush1.xpose.msra.mxu0 0.0
      %1352 = vmatprep.subr.mxu0 0.0
      %1353 = vmatpush1.xpose.msra.mxu0 0.0
      %1354 = vmatprep.subr.mxu0 0.0
      %1355 = vmatpush1.xpose.msra.mxu0 0.0
      %1356 = vmatprep.subr.mxu0 0.0
      %1357 = vmatpush1.xpose.msra.mxu0 0.0
      %1358 = vmatprep.subr.mxu0 0.0
      %1359 = vmatpush1.xpose.msra.mxu0 0.0
      %1360 = vmatprep.subr.mxu0 0.0
      %1361 = vmatpush1.xpose.msra.mxu0 0.0
      %1362 = vmatprep.subr.mxu0 0.0
      %1363 = vmatpush1.xpose.msra.mxu0 0.0
      %1364 = vmatprep.subr.mxu0 0.0
      %1365 = vmatpush1.xpose.msra.mxu0 0.0
      %1366 = vmatprep.subr.mxu0 0.0
      %1367 = vmatpush1.xpose.msra.mxu0 0.0
      %1368 = vmatprep.subr.mxu0 0.0
      %1369 = vmatpush1.xpose.msra.mxu0 0.0
      %1370 = vmatprep.subr.mxu0 0.0
      %1371 = vmatpush1.xpose.msra.mxu0 0.0
      %1372 = vmatprep.subr.mxu0 0.0
      %1373 = vmatpush1.xpose.msra.mxu0 0.0
      %1374 = vmatprep.subr.mxu0 0.0
      %1375 = vmatpush1.xpose.msra.mxu0 0.0
      %1376 = vmatprep.subr.mxu0 0.0
      %1377 = vmatpush1.xpose.msra.mxu0 0.0
      %1378 = vmatprep.subr.mxu0 0.0
      %1379 = vmatpush1.xpose.msra.mxu0 0.0
      %1380 = vmatprep.subr.mxu0 0.0
      %1381 = vmatpush1.xpose.msra.mxu0 0.0
      %1382 = vmatprep.subr.mxu0 0.0
      %1383 = vmatpush1.xpose.msra.mxu0 0.0
      %1384 = vmatprep.subr.mxu0 0.0
      %1385 = vmatpush1.xpose.msra.mxu0 0.0
      %1386 = vmatprep.subr.mxu0 0.0
      %1387 = vmatpush1.xpose.msra.mxu0 0.0
      %1388 = vmatprep.subr.mxu0 0.0
      %1389 = vmatpush1.xpose.msra.mxu0 0.0
      %1390 = vmatprep.subr.mxu0 0.0
      %1391 = vmatpush1.xpose.msra.mxu0 0.0
      %1392 = vmatprep.subr.mxu0 0.0
      %1393 = vmatpush1.xpose.msra.mxu0 0.0
      %1394 = vmatprep.mubr.f32.mxu0 0.0
      %1395 = vmatmul.mubr.f32.gmra.mrb[0].mxu0 %v1326
      %v1396 = vpop.f32.mrb[0].mxu0
      %v1397 = vadd.f32 0.0, %v1396
      %v1398 = vpop.f32.mrb[0].mxu0
      %1399 = vdwg.mxu0
      %v1400 = vmul.f32 %v1397, 0.35355338
      %v1401 = vadd.f32 %v1400, %v1232
      %v1402 = vsel %vm462, %v1401, -inf
      %1403 = vmax.xlane.f32.xlu0 %v1402
      %v1404 = vpop.xlane.xlu0 %1403
      %v1405 = vsub.f32 %v1401, %v1404
      %v1406 = vmul.f32 %v1405, 1.442695
      %v1407 = vpow.pop %v1406
      %v1408 = vsel %vm462, %v1407, 0.0
      %1409 = vadd.xlane.f32.xlu0 %v1408
      %v1410 = vpop.xlane.xlu0 %1409
      %v1411 = vrcp.pop %v1410
      %v1412 = vmul.f32 %v1407, %v1411
      %1413 = vrot.lane.b32.xlu0 %v455, 56
      %v1414 = vpop.permute.xlu0 %1413
      %v1417 = vsel %vm462, %v1412, 0
      %1419 = vmatprep.subr.mxu0 0.0
      %1420 = vmatpush1.msra.mxu0 %v1414
      %1421 = vmatprep.subr.mxu0 0.0
      %1422 = vmatpush1.msra.mxu0 0.0
      %1423 = vmatprep.subr.mxu0 0.0
      %1424 = vmatpush1.msra.mxu0 0.0
      %1425 = vmatprep.subr.mxu0 0.0
      %1426 = vmatpush1.msra.mxu0 0.0
      %1427 = vmatprep.subr.mxu0 0.0
      %1428 = vmatpush1.msra.mxu0 0.0
      %1429 = vmatprep.subr.mxu0 0.0
      %1430 = vmatpush1.msra.mxu0 0.0
      %1431 = vmatprep.subr.mxu0 0.0
      %1432 = vmatpush1.msra.mxu0 0.0
      %1433 = vmatprep.subr.mxu0 0.0
      %1434 = vmatpush1.msra.mxu0 0.0
      %1435 = vmatprep.subr.mxu0 0.0
      %1436 = vmatpush1.msra.mxu0 0.0
      %1437 = vmatprep.subr.mxu0 0.0
      %1438 = vmatpush1.msra.mxu0 0.0
      %1439 = vmatprep.subr.mxu0 0.0
      %1440 = vmatpush1.msra.mxu0 0.0
      %1441 = vmatprep.subr.mxu0 0.0
      %1442 = vmatpush1.msra.mxu0 0.0
      %1443 = vmatprep.subr.mxu0 0.0
      %1444 = vmatpush1.msra.mxu0 0.0
      %1445 = vmatprep.subr.mxu0 0.0
      %1446 = vmatpush1.msra.mxu0 0.0
      %1447 = vmatprep.subr.mxu0 0.0
      %1448 = vmatpush1.msra.mxu0 0.0
      %1449 = vmatprep.subr.mxu0 0.0
      %1450 = vmatpush1.msra.mxu0 0.0
      %1451 = vmatprep.subr.mxu0 0.0
      %1452 = vmatpush1.msra.mxu0 0.0
      %1453 = vmatprep.subr.mxu0 0.0
      %1454 = vmatpush1.msra.mxu0 0.0
      %1455 = vmatprep.subr.mxu0 0.0
      %1456 = vmatpush1.msra.mxu0 0.0
      %1457 = vmatprep.subr.mxu0 0.0
      %1458 = vmatpush1.msra.mxu0 0.0
      %1459 = vmatprep.subr.mxu0 0.0
      %1460 = vmatpush1.msra.mxu0 0.0
      %1461 = vmatprep.subr.mxu0 0.0
      %1462 = vmatpush1.msra.mxu0 0.0
      %1463 = vmatprep.subr.mxu0 0.0
      %1464 = vmatpush1.msra.mxu0 0.0
      %1465 = vmatprep.subr.mxu0 0.0
      %1466 = vmatpush1.msra.mxu0 0.0
      %1467 = vmatprep.subr.mxu0 0.0
      %1468 = vmatpush1.msra.mxu0 0.0
      %1469 = vmatprep.subr.mxu0 0.0
      %1470 = vmatpush1.msra.mxu0 0.0
      %1471 = vmatprep.subr.mxu0 0.0
      %1472 = vmatpush1.msra.mxu0 0.0
      %1473 = vmatprep.subr.mxu0 0.0
      %1474 = vmatpush1.msra.mxu0 0.0
      %1475 = vmatprep.subr.mxu0 0.0
      %1476 = vmatpush1.msra.mxu0 0.0
      %1477 = vmatprep.subr.mxu0 0.0
      %1478 = vmatpush1.msra.mxu0 0.0
      %1479 = vmatprep.subr.mxu0 0.0
      %1480 = vmatpush1.msra.mxu0 0.0
      %1481 = vmatprep.subr.mxu0 0.0
      %1482 = vmatpush1.msra.mxu0 0.0
      %1483 = vmatprep.mubr.f32.mxu0 0.0
      %1484 = vmatmul.mubr.f32.gmra.mrb[0].mxu0 %v1417
      %v1485 = vpop.f32.mrb[0].mxu0
      %v1486 = vadd.f32 0.0, %v1485
      %v1487 = vpop.f32.mrb[0].mxu0
      %1488 = vdwg.mxu0
      %1490 = vrot.lane.b32.xlu0 %v1486, 8
      %v1491 = vpop.permute.xlu0 %1490
      %1493 = vst.msk [vmem:[#allocation3 + $0x8] sm:$0xff] %vm802, %v1491
      %1494 = vrot.lane.b32.xlu0 %v455, 112
      %v1495 = vpop.permute.xlu0 %1494
      %1496 = vrot.lane.b32.xlu0 %v455, 80
      %v1497 = vpop.permute.xlu0 %1496
      %v1498 = vsel %vm462, %v1495, 0
      %v1500 = vsel %vm462, %v1497, 0
      %1502 = vmatprep.subr.mxu0 0.0
      %1503 = vmatpush1.xpose.msra.mxu0 %v1500
      %1504 = vmatprep.subr.mxu0 0.0
      %1505 = vmatpush1.xpose.msra.mxu0 0.0
      %1506 = vmatprep.subr.mxu0 0.0
      %1507 = vmatpush1.xpose.msra.mxu0 0.0
      %1508 = vmatprep.subr.mxu0 0.0
      %1509 = vmatpush1.xpose.msra.mxu0 0.0
      %1510 = vmatprep.subr.mxu0 0.0
      %1511 = vmatpush1.xpose.msra.mxu0 0.0
      %1512 = vmatprep.subr.mxu0 0.0
      %1513 = vmatpush1.xpose.msra.mxu0 0.0
      %1514 = vmatprep.subr.mxu0 0.0
      %1515 = vmatpush1.xpose.msra.mxu0 0.0
      %1516 = vmatprep.subr.mxu0 0.0
      %1517 = vmatpush1.xpose.msra.mxu0 0.0
      %1518 = vmatprep.subr.mxu0 0.0
      %1519 = vmatpush1.xpose.msra.mxu0 0.0
      %1520 = vmatprep.subr.mxu0 0.0
      %1521 = vmatpush1.xpose.msra.mxu0 0.0
      %1522 = vmatprep.subr.mxu0 0.0
      %1523 = vmatpush1.xpose.msra.mxu0 0.0
      %1524 = vmatprep.subr.mxu0 0.0
      %1525 = vmatpush1.xpose.msra.mxu0 0.0
      %1526 = vmatprep.subr.mxu0 0.0
      %1527 = vmatpush1.xpose.msra.mxu0 0.0
      %1528 = vmatprep.subr.mxu0 0.0
      %1529 = vmatpush1.xpose.msra.mxu0 0.0
      %1530 = vmatprep.subr.mxu0 0.0
      %1531 = vmatpush1.xpose.msra.mxu0 0.0
      %1532 = vmatprep.subr.mxu0 0.0
      %1533 = vmatpush1.xpose.msra.mxu0 0.0
      %1534 = vmatprep.subr.mxu0 0.0
      %1535 = vmatpush1.xpose.msra.mxu0 0.0
      %1536 = vmatprep.subr.mxu0 0.0
      %1537 = vmatpush1.xpose.msra.mxu0 0.0
      %1538 = vmatprep.subr.mxu0 0.0
      %1539 = vmatpush1.xpose.msra.mxu0 0.0
      %1540 = vmatprep.subr.mxu0 0.0
      %1541 = vmatpush1.xpose.msra.mxu0 0.0
      %1542 = vmatprep.subr.mxu0 0.0
      %1543 = vmatpush1.xpose.msra.mxu0 0.0
      %1544 = vmatprep.subr.mxu0 0.0
      %1545 = vmatpush1.xpose.msra.mxu0 0.0
      %1546 = vmatprep.subr.mxu0 0.0
      %1547 = vmatpush1.xpose.msra.mxu0 0.0
      %1548 = vmatprep.subr.mxu0 0.0
      %1549 = vmatpush1.xpose.msra.mxu0 0.0
      %1550 = vmatprep.subr.mxu0 0.0
      %1551 = vmatpush1.xpose.msra.mxu0 0.0
      %1552 = vmatprep.subr.mxu0 0.0
      %1553 = vmatpush1.xpose.msra.mxu0 0.0
      %1554 = vmatprep.subr.mxu0 0.0
      %1555 = vmatpush1.xpose.msra.mxu0 0.0
      %1556 = vmatprep.subr.mxu0 0.0
      %1557 = vmatpush1.xpose.msra.mxu0 0.0
      %1558 = vmatprep.subr.mxu0 0.0
      %1559 = vmatpush1.xpose.msra.mxu0 0.0
      %1560 = vmatprep.subr.mxu0 0.0
      %1561 = vmatpush1.xpose.msra.mxu0 0.0
      %1562 = vmatprep.subr.mxu0 0.0
      %1563 = vmatpush1.xpose.msra.mxu0 0.0
      %1564 = vmatprep.subr.mxu0 0.0
      %1565 = vmatpush1.xpose.msra.mxu0 0.0
      %1566 = vmatprep.mubr.f32.mxu0 0.0
      %1567 = vmatmul.mubr.f32.gmra.mrb[0].mxu0 %v1498
      %v1568 = vpop.f32.mrb[0].mxu0
      %v1569 = vadd.f32 0.0, %v1568
      %v1570 = vpop.f32.mrb[0].mxu0
      %1571 = vdwg.mxu0
      %v1572 = vmul.f32 %v1569, 0.35355338
      %v1573 = vadd.f32 %v1572, %v1232
      %v1574 = vsel %vm462, %v1573, -inf
      %1575 = vmax.xlane.f32.xlu0 %v1574
      %v1576 = vpop.xlane.xlu0 %1575
      %v1577 = vsub.f32 %v1573, %v1576
      %v1578 = vmul.f32 %v1577, 1.442695
      %v1579 = vpow.pop %v1578
      %v1580 = vsel %vm462, %v1579, 0.0
      %1581 = vadd.xlane.f32.xlu0 %v1580
      %v1582 = vpop.xlane.xlu0 %1581
      %v1583 = vrcp.pop %v1582
      %v1584 = vmul.f32 %v1579, %v1583
      %1585 = vrot.lane.b32.xlu0 %v455, 48
      %v1586 = vpop.permute.xlu0 %1585
      %v1589 = vsel %vm462, %v1584, 0
      %1591 = vmatprep.subr.mxu0 0.0
      %1592 = vmatpush1.msra.mxu0 %v1586
      %1593 = vmatprep.subr.mxu0 0.0
      %1594 = vmatpush1.msra.mxu0 0.0
      %1595 = vmatprep.subr.mxu0 0.0
      %1596 = vmatpush1.msra.mxu0 0.0
      %1597 = vmatprep.subr.mxu0 0.0
      %1598 = vmatpush1.msra.mxu0 0.0
      %1599 = vmatprep.subr.mxu0 0.0
      %1600 = vmatpush1.msra.mxu0 0.0
      %1601 = vmatprep.subr.mxu0 0.0
      %1602 = vmatpush1.msra.mxu0 0.0
      %1603 = vmatprep.subr.mxu0 0.0
      %1604 = vmatpush1.msra.mxu0 0.0
      %1605 = vmatprep.subr.mxu0 0.0
      %1606 = vmatpush1.msra.mxu0 0.0
      %1607 = vmatprep.subr.mxu0 0.0
      %1608 = vmatpush1.msra.mxu0 0.0
      %1609 = vmatprep.subr.mxu0 0.0
      %1610 = vmatpush1.msra.mxu0 0.0
      %1611 = vmatprep.subr.mxu0 0.0
      %1612 = vmatpush1.msra.mxu0 0.0
      %1613 = vmatprep.subr.mxu0 0.0
      %1614 = vmatpush1.msra.mxu0 0.0
      %1615 = vmatprep.subr.mxu0 0.0
      %1616 = vmatpush1.msra.mxu0 0.0
      %1617 = vmatprep.subr.mxu0 0.0
      %1618 = vmatpush1.msra.mxu0 0.0
      %1619 = vmatprep.subr.mxu0 0.0
      %1620 = vmatpush1.msra.mxu0 0.0
      %1621 = vmatprep.subr.mxu0 0.0
      %1622 = vmatpush1.msra.mxu0 0.0
      %1623 = vmatprep.subr.mxu0 0.0
      %1624 = vmatpush1.msra.mxu0 0.0
      %1625 = vmatprep.subr.mxu0 0.0
      %1626 = vmatpush1.msra.mxu0 0.0
      %1627 = vmatprep.subr.mxu0 0.0
      %1628 = vmatpush1.msra.mxu0 0.0
      %1629 = vmatprep.subr.mxu0 0.0
      %1630 = vmatpush1.msra.mxu0 0.0
      %1631 = vmatprep.subr.mxu0 0.0
      %1632 = vmatpush1.msra.mxu0 0.0
      %1633 = vmatprep.subr.mxu0 0.0
      %1634 = vmatpush1.msra.mxu0 0.0
      %1635 = vmatprep.subr.mxu0 0.0
      %1636 = vmatpush1.msra.mxu0 0.0
      %1637 = vmatprep.subr.mxu0 0.0
      %1638 = vmatpush1.msra.mxu0 0.0
      %1639 = vmatprep.subr.mxu0 0.0
      %1640 = vmatpush1.msra.mxu0 0.0
      %1641 = vmatprep.subr.mxu0 0.0
      %1642 = vmatpush1.msra.mxu0 0.0
      %1643 = vmatprep.subr.mxu0 0.0
      %1644 = vmatpush1.msra.mxu0 0.0
      %1645 = vmatprep.subr.mxu0 0.0
      %1646 = vmatpush1.msra.mxu0 0.0
      %1647 = vmatprep.subr.mxu0 0.0
      %1648 = vmatpush1.msra.mxu0 0.0
      %1649 = vmatprep.subr.mxu0 0.0
      %1650 = vmatpush1.msra.mxu0 0.0
      %1651 = vmatprep.subr.mxu0 0.0
      %1652 = vmatpush1.msra.mxu0 0.0
      %1653 = vmatprep.subr.mxu0 0.0
      %1654 = vmatpush1.msra.mxu0 0.0
      %1655 = vmatprep.mubr.f32.mxu0 0.0
      %1656 = vmatmul.mubr.f32.gmra.mrb[0].mxu0 %v1589
      %v1657 = vpop.f32.mrb[0].mxu0
      %v1658 = vadd.f32 0.0, %v1657
      %v1659 = vpop.f32.mrb[0].mxu0
      %1660 = vdwg.mxu0
      %1662 = vrot.lane.b32.xlu0 %v1658, 16
      %v1663 = vpop.permute.xlu0 %1662
      %1665 = vst.msk [vmem:[#allocation3 + $0x8] sm:$0xff] %vm975, %v1663
      %1666 = vrot.lane.b32.xlu0 %v455, 104
      %v1667 = vpop.permute.xlu0 %1666
      %1668 = vrot.lane.b32.xlu0 %v455, 72
      %v1669 = vpop.permute.xlu0 %1668
      %v1670 = vsel %vm462, %v1667, 0
      %v1672 = vsel %vm462, %v1669, 0
      %1674 = vmatprep.subr.mxu0 0.0
      %1675 = vmatpush1.xpose.msra.mxu0 %v1672
      %1676 = vmatprep.subr.mxu0 0.0
      %1677 = vmatpush1.xpose.msra.mxu0 0.0
      %1678 = vmatprep.subr.mxu0 0.0
      %1679 = vmatpush1.xpose.msra.mxu0 0.0
      %1680 = vmatprep.subr.mxu0 0.0
      %1681 = vmatpush1.xpose.msra.mxu0 0.0
      %1682 = vmatprep.subr.mxu0 0.0
      %1683 = vmatpush1.xpose.msra.mxu0 0.0
      %1684 = vmatprep.subr.mxu0 0.0
      %1685 = vmatpush1.xpose.msra.mxu0 0.0
      %1686 = vmatprep.subr.mxu0 0.0
      %1687 = vmatpush1.xpose.msra.mxu0 0.0
      %1688 = vmatprep.subr.mxu0 0.0
      %1689 = vmatpush1.xpose.msra.mxu0 0.0
      %1690 = vmatprep.subr.mxu0 0.0
      %1691 = vmatpush1.xpose.msra.mxu0 0.0
      %1692 = vmatprep.subr.mxu0 0.0
      %1693 = vmatpush1.xpose.msra.mxu0 0.0
      %1694 = vmatprep.subr.mxu0 0.0
      %1695 = vmatpush1.xpose.msra.mxu0 0.0
      %1696 = vmatprep.subr.mxu0 0.0
      %1697 = vmatpush1.xpose.msra.mxu0 0.0
      %1698 = vmatprep.subr.mxu0 0.0
      %1699 = vmatpush1.xpose.msra.mxu0 0.0
      %1700 = vmatprep.subr.mxu0 0.0
      %1701 = vmatpush1.xpose.msra.mxu0 0.0
      %1702 = vmatprep.subr.mxu0 0.0
      %1703 = vmatpush1.xpose.msra.mxu0 0.0
      %1704 = vmatprep.subr.mxu0 0.0
      %1705 = vmatpush1.xpose.msra.mxu0 0.0
      %1706 = vmatprep.subr.mxu0 0.0
      %1707 = vmatpush1.xpose.msra.mxu0 0.0
      %1708 = vmatprep.subr.mxu0 0.0
      %1709 = vmatpush1.xpose.msra.mxu0 0.0
      %1710 = vmatprep.subr.mxu0 0.0
      %1711 = vmatpush1.xpose.msra.mxu0 0.0
      %1712 = vmatprep.subr.mxu0 0.0
      %1713 = vmatpush1.xpose.msra.mxu0 0.0
      %1714 = vmatprep.subr.mxu0 0.0
      %1715 = vmatpush1.xpose.msra.mxu0 0.0
      %1716 = vmatprep.subr.mxu0 0.0
      %1717 = vmatpush1.xpose.msra.mxu0 0.0
      %1718 = vmatprep.subr.mxu0 0.0
      %1719 = vmatpush1.xpose.msra.mxu0 0.0
      %1720 = vmatprep.subr.mxu0 0.0
      %1721 = vmatpush1.xpose.msra.mxu0 0.0
      %1722 = vmatprep.subr.mxu0 0.0
      %1723 = vmatpush1.xpose.msra.mxu0 0.0
      %1724 = vmatprep.subr.mxu0 0.0
      %1725 = vmatpush1.xpose.msra.mxu0 0.0
      %1726 = vmatprep.subr.mxu0 0.0
      %1727 = vmatpush1.xpose.msra.mxu0 0.0
      %1728 = vmatprep.subr.mxu0 0.0
      %1729 = vmatpush1.xpose.msra.mxu0 0.0
      %1730 = vmatprep.subr.mxu0 0.0
      %1731 = vmatpush1.xpose.msra.mxu0 0.0
      %1732 = vmatprep.subr.mxu0 0.0
      %1733 = vmatpush1.xpose.msra.mxu0 0.0
      %1734 = vmatprep.subr.mxu0 0.0
      %1735 = vmatpush1.xpose.msra.mxu0 0.0
      %1736 = vmatprep.subr.mxu0 0.0
      %1737 = vmatpush1.xpose.msra.mxu0 0.0
      %1738 = vmatprep.mubr.f32.mxu0 0.0
      %1739 = vmatmul.mubr.f32.gmra.mrb[0].mxu0 %v1670
      %v1740 = vpop.f32.mrb[0].mxu0
      %v1741 = vadd.f32 0.0, %v1740
      %v1742 = vpop.f32.mrb[0].mxu0
      %1743 = vdwg.mxu0
      %v1744 = vmul.f32 %v1741, 0.35355338
      %v1745 = vadd.f32 %v1744, %v1232
      %v1746 = vsel %vm462, %v1745, -inf
      %1747 = vmax.xlane.f32.xlu0 %v1746
      %v1748 = vpop.xlane.xlu0 %1747
      %v1749 = vsub.f32 %v1745, %v1748
      %v1750 = vmul.f32 %v1749, 1.442695
      %v1751 = vpow.pop %v1750
      %v1752 = vsel %vm462, %v1751, 0.0
      %1753 = vadd.xlane.f32.xlu0 %v1752
      %v1754 = vpop.xlane.xlu0 %1753
      %v1755 = vrcp.pop %v1754
      %v1756 = vmul.f32 %v1751, %v1755
      %1757 = vrot.lane.b32.xlu0 %v455, 40
      %v1758 = vpop.permute.xlu0 %1757
      %v1761 = vsel %vm462, %v1756, 0
      %1763 = vmatprep.subr.mxu0 0.0
      %1764 = vmatpush1.msra.mxu0 %v1758
      %1765 = vmatprep.subr.mxu0 0.0
      %1766 = vmatpush1.msra.mxu0 0.0
      %1767 = vmatprep.subr.mxu0 0.0
      %1768 = vmatpush1.msra.mxu0 0.0
      %1769 = vmatprep.subr.mxu0 0.0
      %1770 = vmatpush1.msra.mxu0 0.0
      %1771 = vmatprep.subr.mxu0 0.0
      %1772 = vmatpush1.msra.mxu0 0.0
      %1773 = vmatprep.subr.mxu0 0.0
      %1774 = vmatpush1.msra.mxu0 0.0
      %1775 = vmatprep.subr.mxu0 0.0
      %1776 = vmatpush1.msra.mxu0 0.0
      %1777 = vmatprep.subr.mxu0 0.0
      %1778 = vmatpush1.msra.mxu0 0.0
      %1779 = vmatprep.subr.mxu0 0.0
      %1780 = vmatpush1.msra.mxu0 0.0
      %1781 = vmatprep.subr.mxu0 0.0
      %1782 = vmatpush1.msra.mxu0 0.0
      %1783 = vmatprep.subr.mxu0 0.0
      %1784 = vmatpush1.msra.mxu0 0.0
      %1785 = vmatprep.subr.mxu0 0.0
      %1786 = vmatpush1.msra.mxu0 0.0
      %1787 = vmatprep.subr.mxu0 0.0
      %1788 = vmatpush1.msra.mxu0 0.0
      %1789 = vmatprep.subr.mxu0 0.0
      %1790 = vmatpush1.msra.mxu0 0.0
      %1791 = vmatprep.subr.mxu0 0.0
      %1792 = vmatpush1.msra.mxu0 0.0
      %1793 = vmatprep.subr.mxu0 0.0
      %1794 = vmatpush1.msra.mxu0 0.0
      %1795 = vmatprep.subr.mxu0 0.0
      %1796 = vmatpush1.msra.mxu0 0.0
      %1797 = vmatprep.subr.mxu0 0.0
      %1798 = vmatpush1.msra.mxu0 0.0
      %1799 = vmatprep.subr.mxu0 0.0
      %1800 = vmatpush1.msra.mxu0 0.0
      %1801 = vmatprep.subr.mxu0 0.0
      %1802 = vmatpush1.msra.mxu0 0.0
      %1803 = vmatprep.subr.mxu0 0.0
      %1804 = vmatpush1.msra.mxu0 0.0
      %1805 = vmatprep.subr.mxu0 0.0
      %1806 = vmatpush1.msra.mxu0 0.0
      %1807 = vmatprep.subr.mxu0 0.0
      %1808 = vmatpush1.msra.mxu0 0.0
      %1809 = vmatprep.subr.mxu0 0.0
      %1810 = vmatpush1.msra.mxu0 0.0
      %1811 = vmatprep.subr.mxu0 0.0
      %1812 = vmatpush1.msra.mxu0 0.0
      %1813 = vmatprep.subr.mxu0 0.0
      %1814 = vmatpush1.msra.mxu0 0.0
      %1815 = vmatprep.subr.mxu0 0.0
      %1816 = vmatpush1.msra.mxu0 0.0
      %1817 = vmatprep.subr.mxu0 0.0
      %1818 = vmatpush1.msra.mxu0 0.0
      %1819 = vmatprep.subr.mxu0 0.0
      %1820 = vmatpush1.msra.mxu0 0.0
      %1821 = vmatprep.subr.mxu0 0.0
      %1822 = vmatpush1.msra.mxu0 0.0
      %1823 = vmatprep.subr.mxu0 0.0
      %1824 = vmatpush1.msra.mxu0 0.0
      %1825 = vmatprep.subr.mxu0 0.0
      %1826 = vmatpush1.msra.mxu0 0.0
      %1827 = vmatprep.mubr.f32.mxu0 0.0
      %1828 = vmatmul.mubr.f32.gmra.mrb[0].mxu0 %v1761
      %v1829 = vpop.f32.mrb[0].mxu0
      %v1830 = vadd.f32 0.0, %v1829
      %v1831 = vpop.f32.mrb[0].mxu0
      %1832 = vdwg.mxu0
      %1834 = vrot.lane.b32.xlu0 %v1830, 24
      %v1835 = vpop.permute.xlu0 %1834
      %1837 = vst.msk [vmem:[#allocation3 + $0x8] sm:$0xff] %vm1148, %v1835
      %v1838 = vld [vmem:[#allocation3] sm:$0xff]
      %v1839 = vld [vmem:[#allocation3 + $0x8] sm:$0xff]
      %v1840 = vld [vmem:[%s336] sm:$0xff]
      %v1841 = vld [vmem:[%s336 + $0x8] sm:$0xff]
      %v1842 = vld [vmem:[%s336 + $0x10] sm:$0xff]
      %v1843 = vld [vmem:[%s336 + $0x18] sm:$0xff]
      %v1844 = vlaneseq
      %v1845 = vshrl.u32 %v1844, 7
      %v1846 = vsub.s32 1, %v1845
      %v1847 = vrot.slane %v367, %v1846
      %v1849 = vsel %vm376, %v1838, 0
      %v1852 = vsel %vm376, %v1839, 0
      %1854 = vmatprep.subr.mxu0 0.0
      %1855 = vmatpush1.msra.mxu0 %v1840
      %1856 = vmatprep.subr.mxu0 0.0
      %1857 = vmatpush1.msra.mxu0 %v1841
      %1858 = vmatprep.subr.mxu0 0.0
      %1859 = vmatpush1.msra.mxu0 %v1842
      %1860 = vmatprep.subr.mxu0 0.0
      %1861 = vmatpush1.msra.mxu0 %v1843
      %1862 = vmatprep.subr.mxu0 0.0
      %1863 = vmatpush1.msra.mxu0 0.0
      %1864 = vmatprep.subr.mxu0 0.0
      %1865 = vmatpush1.msra.mxu0 0.0
      %1866 = vmatprep.subr.mxu0 0.0
      %1867 = vmatpush1.msra.mxu0 0.0
      %1868 = vmatprep.subr.mxu0 0.0
      %1869 = vmatpush1.msra.mxu0 0.0
      %1870 = vmatprep.subr.mxu0 0.0
      %1871 = vmatpush1.msra.mxu0 0.0
      %1872 = vmatprep.subr.mxu0 0.0
      %1873 = vmatpush1.msra.mxu0 0.0
      %1874 = vmatprep.subr.mxu0 0.0
      %1875 = vmatpush1.msra.mxu0 0.0
      %1876 = vmatprep.subr.mxu0 0.0
      %1877 = vmatpush1.msra.mxu0 0.0
      %1878 = vmatprep.subr.mxu0 0.0
      %1879 = vmatpush1.msra.mxu0 0.0
      %1880 = vmatprep.subr.mxu0 0.0
      %1881 = vmatpush1.msra.mxu0 0.0
      %1882 = vmatprep.subr.mxu0 0.0
      %1883 = vmatpush1.msra.mxu0 0.0
      %1884 = vmatprep.subr.mxu0 0.0
      %1885 = vmatpush1.msra.mxu0 0.0
      %1886 = vmatprep.subr.mxu0 0.0
      %1887 = vmatpush1.msra.mxu0 0.0
      %1888 = vmatprep.subr.mxu0 0.0
      %1889 = vmatpush1.msra.mxu0 0.0
      %1890 = vmatprep.subr.mxu0 0.0
      %1891 = vmatpush1.msra.mxu0 0.0
      %1892 = vmatprep.subr.mxu0 0.0
      %1893 = vmatpush1.msra.mxu0 0.0
      %1894 = vmatprep.subr.mxu0 0.0
      %1895 = vmatpush1.msra.mxu0 0.0
      %1896 = vmatprep.subr.mxu0 0.0
      %1897 = vmatpush1.msra.mxu0 0.0
      %1898 = vmatprep.subr.mxu0 0.0
      %1899 = vmatpush1.msra.mxu0 0.0
      %1900 = vmatprep.subr.mxu0 0.0
      %1901 = vmatpush1.msra.mxu0 0.0
      %1902 = vmatprep.subr.mxu0 0.0
      %1903 = vmatpush1.msra.mxu0 0.0
      %1904 = vmatprep.subr.mxu0 0.0
      %1905 = vmatpush1.msra.mxu0 0.0
      %1906 = vmatprep.subr.mxu0 0.0
      %1907 = vmatpush1.msra.mxu0 0.0
      %1908 = vmatprep.subr.mxu0 0.0
      %1909 = vmatpush1.msra.mxu0 0.0
      %1910 = vmatprep.subr.mxu0 0.0
      %1911 = vmatpush1.msra.mxu0 0.0
      %1912 = vmatprep.subr.mxu0 0.0
      %1913 = vmatpush1.msra.mxu0 0.0
      %1914 = vmatprep.subr.mxu0 0.0
      %1915 = vmatpush1.msra.mxu0 0.0
      %1916 = vmatprep.subr.mxu0 0.0
      %1917 = vmatpush1.msra.mxu0 0.0
      %1918 = vmatprep.mubr.f32.mxu0 0.0
      %1919 = vmatmul.mubr.f32.gmra.mrb[0].mxu0 %v1849
      %v1920 = vpop.f32.mrb[0].mxu0
      %v1921 = vadd.f32 %v1847, %v1920
      %v1922 = vpop.f32.mrb[0].mxu0
      %1923 = vmatprep.mubr.f32.mxu0 0.0
      %1924 = vmatmul.mubr.f32.gmra.mrb[0].mxu0 %v1852
      %v1925 = vpop.f32.mrb[0].mxu0
      %v1926 = vadd.f32 %v1847, %v1925
      %v1927 = vpop.f32.mrb[0].mxu0
      %1928 = vdwg.mxu0
      %v1929 = vadd.f32 %v1921, %v365
      %v1930 = vadd.f32 %v1926, %v366
      %v1931 = vsel %vm376, %v1929, 0.0
      %1932 = vadd.xlane.f32.xlu0 %v1931
      %v1933 = vpop.xlane.xlu0 %1932
      %v1934 = vsel %vm376, %v1930, 0.0
      %1935 = vadd.xlane.f32.xlu0 %v1934
      %v1936 = vpop.xlane.xlu0 %1935
      %v1937 = vrcp.pop 32.0
      %v1938 = vmul.f32 %v1933, %v1937
      %v1939 = vmul.f32 %v1936, %v1937
      %v1940 = vsub.f32 %v1929, %v1938
      %v1941 = vsub.f32 %v1930, %v1939
      %v1942 = vmul.f32 %v1940, %v1940
      %v1943 = vmul.f32 %v1941, %v1941
      %v1944 = vsel %vm376, %v1942, 0.0
      %1945 = vadd.xlane.f32.xlu0 %v1944
      %v1946 = vpop.xlane.xlu0 %1945
      %v1947 = vsel %vm376, %v1943, 0.0
      %1948 = vadd.xlane.f32.xlu0 %v1947
      %v1949 = vpop.xlane.xlu0 %1948
      %v1950 = vmul.f32 %v1946, %v1937
      %v1951 = vmul.f32 %v1949, %v1937
      %v1952 = vadd.f32 %v1950, 1e-12
      %v1953 = vadd.f32 %v1951, 1e-12
      %v1954 = vrsqrt.pop %v1952
      %v1955 = vrsqrt.pop %v1953
      %v1956 = vmul.f32 %v1940, %v1954
      %v1957 = vmul.f32 %v1941, %v1955
      %v1958 = vlaneseq
      %v1959 = vshrl.u32 %v1958, 7
      %v1960 = vsub.s32 2, %v1959
      %v1961 = vrot.slane %v367, %v1960
      %v1962 = vmul.f32 %v1956, %v1961
      %v1963 = vmul.f32 %v1957, %v1961
      %v1964 = vlaneseq
      %v1965 = vshrl.u32 %v1964, 7
      %v1966 = vsub.s32 3, %v1965
      %v1967 = vrot.slane %v367, %v1966
      %v1968 = vadd.f32 %v1962, %v1967
      %v1969 = vadd.f32 %v1963, %v1967
      %v1970 = vld [vmem:[%s341] sm:$0xff]
      %v1971 = vld [vmem:[%s341 + $0x8] sm:$0xff]
      %v1972 = vld [vmem:[%s341 + $0x10] sm:$0xff]
      %v1973 = vld [vmem:[%s341 + $0x18] sm:$0xff]
      %v1974 = vlaneseq
      %v1975 = vshrl.u32 %v1974, 7
      %v1976 = vsub.s32 4, %v1975
      %v1977 = vrot.slane %v367, %v1976
      %v1979 = vsel %vm376, %v1968, 0
      %v1982 = vsel %vm376, %v1969, 0
      %1984 = vmatprep.subr.mxu0 0.0
      %1985 = vmatpush1.msra.mxu0 %v1970
      %1986 = vmatprep.subr.mxu0 0.0
      %1987 = vmatpush1.msra.mxu0 %v1971
      %1988 = vmatprep.subr.mxu0 0.0
      %1989 = vmatpush1.msra.mxu0 %v1972
      %1990 = vmatprep.subr.mxu0 0.0
      %1991 = vmatpush1.msra.mxu0 %v1973
      %1992 = vmatprep.subr.mxu0 0.0
      %1993 = vmatpush1.msra.mxu0 0.0
      %1994 = vmatprep.subr.mxu0 0.0
      %1995 = vmatpush1.msra.mxu0 0.0
      %1996 = vmatprep.subr.mxu0 0.0
      %1997 = vmatpush1.msra.mxu0 0.0
      %1998 = vmatprep.subr.mxu0 0.0
      %1999 = vmatpush1.msra.mxu0 0.0
      %2000 = vmatprep.subr.mxu0 0.0
      %2001 = vmatpush1.msra.mxu0 0.0
      %2002 = vmatprep.subr.mxu0 0.0
      %2003 = vmatpush1.msra.mxu0 0.0
      %2004 = vmatprep.subr.mxu0 0.0
      %2005 = vmatpush1.msra.mxu0 0.0
      %2006 = vmatprep.subr.mxu0 0.0
      %2007 = vmatpush1.msra.mxu0 0.0
      %2008 = vmatprep.subr.mxu0 0.0
      %2009 = vmatpush1.msra.mxu0 0.0
      %2010 = vmatprep.subr.mxu0 0.0
      %2011 = vmatpush1.msra.mxu0 0.0
      %2012 = vmatprep.subr.mxu0 0.0
      %2013 = vmatpush1.msra.mxu0 0.0
      %2014 = vmatprep.subr.mxu0 0.0
      %2015 = vmatpush1.msra.mxu0 0.0
      %2016 = vmatprep.subr.mxu0 0.0
      %2017 = vmatpush1.msra.mxu0 0.0
      %2018 = vmatprep.subr.mxu0 0.0
      %2019 = vmatpush1.msra.mxu0 0.0
      %2020 = vmatprep.subr.mxu0 0.0
      %2021 = vmatpush1.msra.mxu0 0.0
      %2022 = vmatprep.subr.mxu0 0.0
      %2023 = vmatpush1.msra.mxu0 0.0
      %2024 = vmatprep.subr.mxu0 0.0
      %2025 = vmatpush1.msra.mxu0 0.0
      %2026 = vmatprep.subr.mxu0 0.0
      %2027 = vmatpush1.msra.mxu0 0.0
      %2028 = vmatprep.subr.mxu0 0.0
      %2029 = vmatpush1.msra.mxu0 0.0
      %2030 = vmatprep.subr.mxu0 0.0
      %2031 = vmatpush1.msra.mxu0 0.0
      %2032 = vmatprep.subr.mxu0 0.0
      %2033 = vmatpush1.msra.mxu0 0.0
      %2034 = vmatprep.subr.mxu0 0.0
      %2035 = vmatpush1.msra.mxu0 0.0
      %2036 = vmatprep.subr.mxu0 0.0
      %2037 = vmatpush1.msra.mxu0 0.0
      %2038 = vmatprep.subr.mxu0 0.0
      %2039 = vmatpush1.msra.mxu0 0.0
      %2040 = vmatprep.subr.mxu0 0.0
      %2041 = vmatpush1.msra.mxu0 0.0
      %2042 = vmatprep.subr.mxu0 0.0
      %2043 = vmatpush1.msra.mxu0 0.0
      %2044 = vmatprep.subr.mxu0 0.0
      %2045 = vmatpush1.msra.mxu0 0.0
      %2046 = vmatprep.subr.mxu0 0.0
      %2047 = vmatpush1.msra.mxu0 0.0
      %2048 = vmatprep.mubr.f32.mxu0 0.0
      %2049 = vmatmul.mubr.f32.gmra.mrb[0].mxu0 %v1979
      %v2050 = vpop.f32.mrb[0].mxu0
      %v2051 = vadd.f32 %v1977, %v2050
      %v2052 = vpop.f32.mrb[0].mxu0
      %2053 = vmatprep.mubr.f32.mxu0 0.0
      %2054 = vmatmul.mubr.f32.gmra.mrb[0].mxu0 %v1982
      %v2055 = vpop.f32.mrb[0].mxu0
      %v2056 = vadd.f32 %v1977, %v2055
      %v2057 = vpop.f32.mrb[0].mxu0
      %2058 = vdwg.mxu0
      %v2059 = vmul.f32 %v2051, %v2051
      %v2060 = vmul.f32 %v2056, %v2056
      %v2061 = vmul.f32 %v2051, %v2059
      %v2062 = vmul.f32 %v2056, %v2060
      %v2063 = vmul.f32 %v2061, 0.044715
      %v2064 = vmul.f32 %v2062, 0.044715
      %v2065 = vadd.f32 %v2051, %v2063
      %v2066 = vadd.f32 %v2056, %v2064
      %v2067 = vmul.f32 %v2065, 0.7978846
      %v2068 = vmul.f32 %v2066, 0.7978846
      %v2069 = vtanh.pop %v2067
      %v2070 = vtanh.pop %v2068
      %v2071 = vadd.f32 %v2069, 1.0
      %v2072 = vadd.f32 %v2070, 1.0
      %v2073 = vmul.f32 %v2071, 0.5
      %v2074 = vmul.f32 %v2072, 0.5
      %v2075 = vmul.f32 %v2051, %v2073
      %v2076 = vmul.f32 %v2056, %v2074
      %v2077 = vld [vmem:[%s346] sm:$0xff]
      %v2078 = vld [vmem:[%s346 + $0x8] sm:$0xff]
      %v2079 = vld [vmem:[%s346 + $0x10] sm:$0xff]
      %v2080 = vld [vmem:[%s346 + $0x18] sm:$0xff]
      %v2081 = vld [vmem:[%s346 + $0x20] sm:$0xff]
      %v2082 = vld [vmem:[%s346 + $0x28] sm:$0xff]
      %v2083 = vld [vmem:[%s346 + $0x30] sm:$0xff]
      %v2084 = vld [vmem:[%s346 + $0x38] sm:$0xff]
      %v2085 = vld [vmem:[%s346 + $0x40] sm:$0xff]
      %v2086 = vld [vmem:[%s346 + $0x48] sm:$0xff]
      %v2087 = vld [vmem:[%s346 + $0x50] sm:$0xff]
      %v2088 = vld [vmem:[%s346 + $0x58] sm:$0xff]
      %v2089 = vld [vmem:[%s346 + $0x60] sm:$0xff]
      %v2090 = vld [vmem:[%s346 + $0x68] sm:$0xff]
      %v2091 = vld [vmem:[%s346 + $0x70] sm:$0xff]
      %v2092 = vld [vmem:[%s346 + $0x78] sm:$0xff]
      %v2093 = vlaneseq
      %v2094 = vshrl.u32 %v2093, 7
      %v2095 = vsub.s32 5, %v2094
      %v2096 = vrot.slane %v367, %v2095
      %2097 = vmatprep.subr.mxu0 0.0
      %2098 = vmatpush1.msra.mxu0 %v2077
      %2099 = vmatprep.subr.mxu0 0.0
      %2100 = vmatpush1.msra.mxu0 %v2078
      %2101 = vmatprep.subr.mxu0 0.0
      %2102 = vmatpush1.msra.mxu0 %v2079
      %2103 = vmatprep.subr.mxu0 0.0
      %2104 = vmatpush1.msra.mxu0 %v2080
      %2105 = vmatprep.subr.mxu0 0.0
      %2106 = vmatpush1.msra.mxu0 %v2081
      %2107 = vmatprep.subr.mxu0 0.0
      %2108 = vmatpush1.msra.mxu0 %v2082
      %2109 = vmatprep.subr.mxu0 0.0
      %2110 = vmatpush1.msra.mxu0 %v2083
      %2111 = vmatprep.subr.mxu0 0.0
      %2112 = vmatpush1.msra.mxu0 %v2084
      %2113 = vmatprep.subr.mxu0 0.0
      %2114 = vmatpush1.msra.mxu0 %v2085
      %2115 = vmatprep.subr.mxu0 0.0
      %2116 = vmatpush1.msra.mxu0 %v2086
      %2117 = vmatprep.subr.mxu0 0.0
      %2118 = vmatpush1.msra.mxu0 %v2087
      %2119 = vmatprep.subr.mxu0 0.0
      %2120 = vmatpush1.msra.mxu0 %v2088
      %2121 = vmatprep.subr.mxu0 0.0
      %2122 = vmatpush1.msra.mxu0 %v2089
      %2123 = vmatprep.subr.mxu0 0.0
      %2124 = vmatpush1.msra.mxu0 %v2090
      %2125 = vmatprep.subr.mxu0 0.0
      %2126 = vmatpush1.msra.mxu0 %v2091
      %2127 = vmatprep.subr.mxu0 0.0
      %2128 = vmatpush1.msra.mxu0 %v2092
      %2129 = vmatprep.subr.mxu0 0.0
      %2130 = vmatpush1.msra.mxu0 0.0
      %2131 = vmatprep.subr.mxu0 0.0
      %2132 = vmatpush1.msra.mxu0 0.0
      %2133 = vmatprep.subr.mxu0 0.0
      %2134 = vmatpush1.msra.mxu0 0.0
      %2135 = vmatprep.subr.mxu0 0.0
      %2136 = vmatpush1.msra.mxu0 0.0
      %2137 = vmatprep.subr.mxu0 0.0
      %2138 = vmatpush1.msra.mxu0 0.0
      %2139 = vmatprep.subr.mxu0 0.0
      %2140 = vmatpush1.msra.mxu0 0.0
      %2141 = vmatprep.subr.mxu0 0.0
      %2142 = vmatpush1.msra.mxu0 0.0
      %2143 = vmatprep.subr.mxu0 0.0
      %2144 = vmatpush1.msra.mxu0 0.0
      %2145 = vmatprep.subr.mxu0 0.0
      %2146 = vmatpush1.msra.mxu0 0.0
      %2147 = vmatprep.subr.mxu0 0.0
      %2148 = vmatpush1.msra.mxu0 0.0
      %2149 = vmatprep.subr.mxu0 0.0
      %2150 = vmatpush1.msra.mxu0 0.0
      %2151 = vmatprep.subr.mxu0 0.0
      %2152 = vmatpush1.msra.mxu0 0.0
      %2153 = vmatprep.subr.mxu0 0.0
      %2154 = vmatpush1.msra.mxu0 0.0
      %2155 = vmatprep.subr.mxu0 0.0
      %2156 = vmatpush1.msra.mxu0 0.0
      %2157 = vmatprep.subr.mxu0 0.0
      %2158 = vmatpush1.msra.mxu0 0.0
      %2159 = vmatprep.subr.mxu0 0.0
      %2160 = vmatpush1.msra.mxu0 0.0
      %2161 = vmatprep.mubr.f32.mxu0 0.0
      %2162 = vmatmul.mubr.f32.gmra.mrb[0].mxu0 %v2075
      %v2163 = vpop.f32.mrb[0].mxu0
      %v2164 = vadd.f32 %v2096, %v2163
      %v2165 = vpop.f32.mrb[0].mxu0
      %2166 = vmatprep.mubr.f32.mxu0 0.0
      %2167 = vmatmul.mubr.f32.gmra.mrb[0].mxu0 %v2076
      %v2168 = vpop.f32.mrb[0].mxu0
      %v2169 = vadd.f32 %v2096, %v2168
      %v2170 = vpop.f32.mrb[0].mxu0
      %2171 = vdwg.mxu0
      %v2172 = vadd.f32 %v2164, %v1968
      %v2173 = vadd.f32 %v2169, %v1969
      %v2174 = vsel %vm376, %v2172, 0.0
      %2175 = vadd.xlane.f32.xlu0 %v2174
      %v2176 = vpop.xlane.xlu0 %2175
      %v2177 = vsel %vm376, %v2173, 0.0
      %2178 = vadd.xlane.f32.xlu0 %v2177
      %v2179 = vpop.xlane.xlu0 %2178
      %v2180 = vmul.f32 %v2176, %v1937
      %v2181 = vmul.f32 %v2179, %v1937
      %v2182 = vsub.f32 %v2172, %v2180
      %v2183 = vsub.f32 %v2173, %v2181
      %v2184 = vmul.f32 %v2182, %v2182
      %v2185 = vmul.f32 %v2183, %v2183
      %v2186 = vsel %vm376, %v2184, 0.0
      %2187 = vadd.xlane.f32.xlu0 %v2186
      %v2188 = vpop.xlane.xlu0 %2187
      %v2189 = vsel %vm376, %v2185, 0.0
      %2190 = vadd.xlane.f32.xlu0 %v2189
      %v2191 = vpop.xlane.xlu0 %2190
      %v2192 = vmul.f32 %v2188, %v1937
      %v2193 = vmul.f32 %v2191, %v1937
      %v2194 = vadd.f32 %v2192, 1e-12
      %v2195 = vadd.f32 %v2193, 1e-12
      %v2196 = vrsqrt.pop %v2194
      %v2197 = vrsqrt.pop %v2195
      %v2198 = vmul.f32 %v2182, %v2196
      %v2199 = vmul.f32 %v2183, %v2197
      %v2200 = vlaneseq
      %v2201 = vshrl.u32 %v2200, 7
      %v2202 = vsub.s32 6, %v2201
      %v2203 = vrot.slane %v367, %v2202
      %v2204 = vmul.f32 %v2198, %v2203
      %v2205 = vmul.f32 %v2199, %v2203
      %v2206 = vlaneseq
      %v2207 = vshrl.u32 %v2206, 7
      %v2208 = vsub.s32 7, %v2207
      %v2209 = vrot.slane %v367, %v2208
      %v2210 = vadd.f32 %v2204, %v2209
      %v2211 = vadd.f32 %v2205, %v2209
      %2212 = vst.msk [vmem:[#allocation2] sm:$0xff] %vm376, %v2210
      %2213 = vst.msk [vmem:[#allocation2 + $0x8] sm:$0xff] %vm376, %v2211
      %2214 = vst.msk [vmem:[%s355] sm:$0xff] %vm376, %v2210
      %2215 = vst.msk [vmem:[%s355 + $0x8] sm:$0xff] %vm376, %v2211
      %p2216 = scmp.lt.s32.totalorder %s18, 1
      %s2217 = scalar_select %p2216, %s18, 1
      %s2218 = smul.addr %s2217, 2
      %s2219 = smul.addr %s2218, 8
      %s2220 = scalar_lea.vmem %s7, %s2219
      // Predicated region
      $region53: #{transformer_layer_forward.1} parent=47 // pred_check
        %p2221 = pneg %p208
      $region54: #{transformer_layer_forward.1} parent=47 // pred_check_branch
        %2223 = sbr.rel (%p2221) target = $region56
      $region55: #{transformer_layer_forward.1} parent=47 // pred_region
        _
      $region56: #{transformer_layer_forward.1} parent=47 // pred_fallthru
        _
    $region48: #{transformer_layer_forward.1} parent=5 // pred_fallthru
      _
    %p2224 = scmp.le.s32.totalorder 2, %s13
    // Predicated region
    $region57: #{transformer_layer_forward.1} parent=5 // pred_check
      %p2225 = pneg %p2224
    $region58: #{transformer_layer_forward.1} parent=5 // pred_check_branch
      %2227 = sbr.rel (%p2225) target = $region60
    $region59: #{transformer_layer_forward.1} parent=5 // pred_region
      %s2228 = ssub.s32 %s13, 2
      // Predicated region
      $region61: #{transformer_layer_forward.1} parent=59 // pred_check
        %p2229 = pneg %p214
      $region62: #{transformer_layer_forward.1} parent=59 // pred_check_branch
        %2231 = sbr.rel (%p2229) target = $region64
      $region63: #{transformer_layer_forward.1} parent=59 // pred_region
        %p2232 = scmp.lt.s32.totalorder %s19, 1
        %s2233 = scalar_select %p2232, %s19, 1
        %s2234 = smul.addr %s2233, 2
        %s2235 = smul.addr %s2234, 8
        %s2236 = scalar_lea.vmem %s7, %s2235
      $region64: #{transformer_layer_forward.1} parent=59 // pred_fallthru
        _
    $region60: #{transformer_layer_forward.1} parent=5 // pred_fallthru
      _
  $region6: #{transformer_layer_forward.1} parent=0 // loop_footer
    %s17 = sadd.s32 1, %s13
  $region7: #{transformer_layer_forward.1} parent=0 // loop_footer_branch
    %12 = sbr.rel target = $region3
  $region8: #{transformer_layer_forward.1} parent=0 // loop_exit
    _

</llo_original>
